<compile_context>
chip_gen: v5e
topology: v5e:2x2
jax: 0.10.0
libtpu: 0.0.40
codegen_flags: <defaults>
</compile_context>

<pallas_src>
import jax
import jax.numpy as jnp
from jax import lax
from jax.experimental import pallas as pl
from jax.experimental.pallas import tpu as pltpu


def gt_layer_kernel(rows_r_ref, rows_c_ref, cols_r_ref, embt_ref, wqt_ref,
                    wkvt_ref, rest_ref, attt_ref, embq_s, embkv_s, norm_s,
                    expc_s):
    """Two-phase kernel over a (phase, edge-tile) grid, feature-major layout.

    phase 0: gather q/k, exp(logits) -> cache + scatter-add softmax
             denominators into norm_s [K, N].
    phase 1: gather v + per-edge denominator, normalize with the cached
             exp(logits), scatter-add weighted values into rest_ref [D, N],
             emit att as a lane-dense [K, e_pad] slab.
    """
    phase = pl.program_id(0)
    tile = pl.program_id(1)
    D, N = embt_ref.shape
    tE = rows_r_ref.shape[1]
    K = norm_s.shape[0]
    dh = D // K
    cdt = embq_s.dtype          # MXU operand dtype (tables / one-hots / scatter)

    # ---- once per grid: node-level Q / fused-[K|V] projections + zero accums.
    @pl.when(jnp.logical_and(phase == 0, tile == 0))
    def _init_tables():
        embq_s[...] = jnp.dot(wqt_ref[...], embt_ref[...],
                              preferred_element_type=jnp.float32).astype(cdt)
        embkv_s[...] = jnp.dot(wkvt_ref[...], embt_ref[...],
                               preferred_element_type=jnp.float32).astype(cdt)
        norm_s[...] = jnp.zeros_like(norm_s)

    @pl.when(jnp.logical_and(phase == 1, tile == 0))
    def _init_output():
        rest_ref[...] = jnp.zeros_like(rest_ref)

    # ---- per-tile one-hot selection matrices (0/1: exact in bf16).
    # Padded sentinel edges (index == N) match no node -> all-zero columns.
    rows_r = rows_r_ref[...]                                   # [1, tE] int32
    rows_c = rows_c_ref[...]                                   # [tE, 1] int32
    cols_r = cols_r_ref[...]                                   # [1, tE] int32
    iota_ne = lax.broadcasted_iota(jnp.int32, (N, tE), 0)
    iota_en = lax.broadcasted_iota(jnp.int32, (tE, N), 1)
    oh_rows_ne = (iota_ne == rows_r).astype(cdt)               # [N, tE] gather
    oh_cols_ne = (iota_ne == cols_r).astype(cdt)               # [N, tE] gather
    oh_rows_en = (rows_c == iota_en).astype(cdt)               # [tE, N] scatter

    e0 = pl.multiple_of(tile * tE, 128)    # lane offset of this tile in e_pad

    @pl.when(phase == 0)
    def _phase0():
        # phase-aware gathers: only Q and the K half of the fused table.
        q_t = jnp.dot(embq_s[...], oh_rows_ne,
                      preferred_element_type=jnp.float32)          # [D, tE]
        k_t = jnp.dot(embkv_s[0:D, :], oh_cols_ne,
                      preferred_element_type=jnp.float32)          # [D, tE]
        # per-head logits: sublane group-sum over each head's dh rows (no MXU).
        logits = jnp.sum((q_t * k_t).reshape(K, dh, tE), axis=1)   # [K, tE]
        expatt = jnp.exp(jnp.clip(logits, -10.0, 10.0))            # [K, tE]
        # round once so numerator (cache) and denominator (scatter) match.
        expatt_c = expatt.astype(cdt)
        expc_s[:, pl.ds(e0, tE)] = expatt_c.astype(jnp.float32)    # cache
        norm_s[...] += jnp.dot(expatt_c, oh_rows_en,
                               preferred_element_type=jnp.float32)  # [K, N]

    @pl.when(phase == 1)
    def _phase1():
        # phase-aware gathers: only the V half of the fused table.
        v_t = jnp.dot(embkv_s[D:2 * D, :], oh_cols_ne,
                      preferred_element_type=jnp.float32)           # [D, tE]
        norme = jnp.dot(norm_s[...], oh_rows_ne.astype(jnp.float32),
                        preferred_element_type=jnp.float32)         # [K, tE]
        expatt = expc_s[:, pl.ds(e0, tE)]           # cached: no q/k/exp redo
        attf = expatt / (norme + 1e-8)                              # [K, tE]
        # mask padded edges so the full lane-dense att slab holds no garbage.
        attf = jnp.where(rows_r < N, attf, 0.0)
        attt_ref[:, pl.ds(e0, tE)] = attf           # lane-dense store (tE lanes)
        # broadcast each head weight over its dh sublanes: one VPU multiply,
        # no per-head slice + concat.
        resedge = (attf[:, None, :] * v_t.reshape(K, dh, tE)).reshape(D, tE)
        rest_ref[...] += jnp.dot(resedge.astype(cdt), oh_rows_en,
                                 preferred_element_type=jnp.float32)  # [D, N]


def gt_layer(rows, cols, embeds, qTrans, kTrans, vTrans, K, *, tile_e=256,
             mxu_dtype=jnp.bfloat16):
    """Pallas implementation of GTLayer.forward.

    rows, cols: int32 [E]   -- adj._indices()
    embeds    : f32  [N, D]
    mxu_dtype : dtype of projected tables / one-hots / scatter operands
                (bf16 = full-rate MXU + half the table VMEM; f32 = exact).
    Returns (resEmbeds [N, D], att [E, K]) as in the PyTorch module.
    """
    N, D = embeds.shape
    E = rows.shape[0]
    assert D % K == 0, "embedding_size must be divisible by K"
    assert tile_e % 128 == 0, "edge tile must be lane-aligned"
    num_tiles = pl.cdiv(E, tile_e)
    e_pad = num_tiles * tile_e

    rows = rows.astype(jnp.int32)
    cols = cols.astype(jnp.int32)
    if e_pad != E:
        # sentinel index N matches no node -> padded edges contribute nothing.
        pad = jnp.full((e_pad - E,), N, jnp.int32)
        rows = jnp.concatenate([rows, pad])
        cols = jnp.concatenate([cols, pad])
    rows_r = rows.reshape(1, e_pad)   # builds [N, tE] gather one-hot + pad mask
    rows_c = rows.reshape(e_pad, 1)   # builds [tE, N] scatter one-hot
    cols_r = cols.reshape(1, e_pad)   # builds [N, tE] gather one-hot

    # feature-major ("transposed") operands: lane dimension = nodes / edges.
    embT = embeds.astype(jnp.float32).T                                # [D, N]
    wqT = qTrans.astype(jnp.float32).T                                 # [D, D]
    wkvT = jnp.concatenate([kTrans.T, vTrans.T], axis=0).astype(jnp.float32)  # [2D, D]

    flops = int(2 * 3 * D * D * N                 # node-level projections
                + 2 * 3 * D * N * e_pad           # q/k/v one-hot gathers
                + 2 * 2 * K * N * e_pad           # norm scatter + gather
                + 2 * D * N * e_pad               # res scatter
                + 4 * D * e_pad)                  # logits + weighting (VPU)
    transcendentals = e_pad * K                   # exp only in phase 0 now
    bytes_accessed = int(4 * (3 * e_pad + 2 * N * D + 3 * D * D + e_pad * K))

    # VMEM budget from actual buffers (x2 double-buffer margin + headroom),
    # capped at 56 MiB so v7x (64 MiB/TC) keeps compiler scratch headroom.
    itm = jnp.dtype(mxu_dtype).itemsize
    resident_bytes = (4 * (D * N + 3 * D * D + D * N + K * e_pad)   # ins + outs
                      + 4 * 3 * e_pad                               # edge indices
                      + itm * 3 * D * N                             # q/kv tables
                      + 4 * (K * N + K * e_pad))                    # norm + cache
    vmem_limit = int(min(56 * 2**20, max(32 * 2**20,
                                         2 * resident_bytes + 8 * 2**20)))

    rest, attt = pl.pallas_call(
        gt_layer_kernel,
        out_shape=(jax.ShapeDtypeStruct((D, N), jnp.float32),
                   jax.ShapeDtypeStruct((K, e_pad), jnp.float32)),
        grid_spec=pltpu.PrefetchScalarGridSpec(
            num_scalar_prefetch=0,
            grid=(2, num_tiles),                        # (phase, edge tile)
            in_specs=[
                pl.BlockSpec((1, tile_e), lambda p, t: (0, t)),   # rows (row vec)
                pl.BlockSpec((tile_e, 1), lambda p, t: (t, 0)),   # rows (col vec)
                pl.BlockSpec((1, tile_e), lambda p, t: (0, t)),   # cols (row vec)
                # resident constant-index operands
                # TODO(synk): pipeline_mode=pl.Buffered(1) here to single-buffer
                #             the resident blocks once that path is exercised.
                pl.BlockSpec((D, N), lambda p, t: (0, 0)),        # embeds^T
                pl.BlockSpec((D, D), lambda p, t: (0, 0)),        # qTrans^T
                pl.BlockSpec((2 * D, D), lambda p, t: (0, 0)),    # [kTrans|vTrans]^T
            ],
            out_specs=[
                # resident accumulators: one writeback at grid end, lane-dense.
                pl.BlockSpec((D, N), lambda p, t: (0, 0)),        # resEmbeds^T
                pl.BlockSpec((K, e_pad), lambda p, t: (0, 0)),    # att^T
            ],
            scratch_shapes=[
                pltpu.VMEM((D, N), mxu_dtype),        # (embeds @ qTrans)^T
                pltpu.VMEM((2 * D, N), mxu_dtype),    # (embeds @ [k|v]Trans)^T
                pltpu.VMEM((K, N), jnp.float32),      # softmax denominators
                pltpu.VMEM((K, e_pad), jnp.float32),  # cached exp(logits)
            ],
        ),
        compiler_params=pltpu.CompilerParams(
            # Both axes carry accumulator state -> sequential on one TC.
            # TODO(synk): v7x megacore -- pre-partition edges by destination-node
            #             half (scalar-prefetched offsets) and add a leading
            #             "parallel" axis so each TensorCore owns half the nodes.
            dimension_semantics=("arbitrary", "arbitrary"),
            vmem_limit_bytes=vmem_limit,
        ),
        cost_estimate=pl.CostEstimate(flops=flops,
                                      transcendentals=transcendentals,
                                      bytes_accessed=bytes_accessed),
    )(rows_r, rows_c, cols_r, embT, wqT, wkvT)
    return rest.T, attt.T[:E]


def reference(rows, cols, embeds, qT, kT, vT, K):
    """Pure-JAX port of the PyTorch forward for verification."""
    N, D = embeds.shape
    dh = D // K
    rowE = embeds[rows]
    colE = embeds[cols]
    qE = (rowE @ qT).reshape(-1, K, dh)
    kE = (colE @ kT).reshape(-1, K, dh)
    vE = (colE @ vT).reshape(-1, K, dh)
    att = jnp.einsum('ehd,ehd->eh', qE, kE)
    att = jnp.clip(att, -10.0, 10.0)
    expAtt = jnp.exp(att)
    attNorm = jnp.zeros((N, K), jnp.float32).at[rows].add(expAtt)[rows]
    att = expAtt / (attNorm + 1e-8)
    res = (att[:, :, None] * vE).reshape(-1, D)
    resN = jnp.zeros((N, D), jnp.float32).at[rows].add(res)
    return resN, att


def xavier_uniform(key, shape):
    fan_in, fan_out = shape
    bound = (6.0 / (fan_in + fan_out)) ** 0.5
    return jax.random.uniform(key, shape, jnp.float32, -bound, bound)


if __name__ == "__main__":
    # config as in GTLayer.__init__
    config = {'embedding_size': 32, 'K': 4}
    D = config['embedding_size']
    K = config['K']
    N = 64       # adj.shape[0]  (number of nodes)
    E = 480      # nonzeros (edges) in adj -> also exercises sentinel padding
    tile_e = 256

    key = jax.random.PRNGKey(0)
    k_emb, k_rows, k_cols, k_q, k_k, k_v = jax.random.split(key, 6)

    embeds = jax.random.normal(k_emb, (N, D), jnp.float32)
    rows = jax.random.randint(k_rows, (E,), 0, N, jnp.int32)   # adj._indices()[0]
    cols = jax.random.randint(k_cols, (E,), 0, N, jnp.int32)   # adj._indices()[1]

    # Deterministic xavier_uniform parameter init (shapes from __init__).
    qTrans = xavier_uniform(k_q, (D, D))
    kTrans = xavier_uniform(k_k, (D, D))
    vTrans = xavier_uniform(k_v, (D, D))

    res_gold, att_gold = reference(rows, cols, embeds, qTrans, kTrans, vTrans, K)

    # 1) exact f32 path (tight check against the reference)
    res32, att32 = gt_layer(rows, cols, embeds, qTrans, kTrans, vTrans, K,
                            tile_e=tile_e, mxu_dtype=jnp.float32)
    jax.block_until_ready((res32, att32))
    assert res32.shape == (N, D) and att32.shape == (E, K)
    assert jnp.allclose(res32, res_gold, atol=1e-3, rtol=1e-3), "resEmbeds mismatch (f32)"
    assert jnp.allclose(att32, att_gold, atol=1e-3, rtol=1e-3), "att mismatch (f32)"

    # 2) bf16 tables / one-hots / scatter operands (f32 accumulation; looser)
    resbf, attbf = gt_layer(rows, cols, embeds, qTrans, kTrans, vTrans, K,
                            tile_e=tile_e, mxu_dtype=jnp.bfloat16)
    jax.block_until_ready((resbf, attbf))
    assert resbf.shape == (N, D) and attbf.shape == (E, K)
    assert jnp.allclose(resbf, res_gold, atol=5e-2, rtol=5e-2), "resEmbeds mismatch (bf16)"
    assert jnp.allclose(attbf, att_gold, atol=5e-2, rtol=5e-2), "att mismatch (bf16)"

    print("KERNEL_OK")
</pallas_src>

<mosaic_0001>
module attributes {stable_mosaic.version = 11 : i64} {
  func.func @gt_layer_kernel(%arg0: i32, %arg1: i32, %arg2: memref<1x256xi32, #tpu.memory_space<vmem>>, %arg3: memref<256x1xi32, #tpu.memory_space<vmem>>, %arg4: memref<1x256xi32, #tpu.memory_space<vmem>>, %arg5: memref<32x64xf32, #tpu.memory_space<vmem>>, %arg6: memref<32x32xf32, #tpu.memory_space<vmem>>, %arg7: memref<64x32xf32, #tpu.memory_space<vmem>>, %arg8: memref<32x64xf32, #tpu.memory_space<vmem>>, %arg9: memref<4x512xf32, #tpu.memory_space<vmem>>, %arg10: memref<32x64xf32, #tpu.memory_space<vmem>>, %arg11: memref<64x64xf32, #tpu.memory_space<vmem>>, %arg12: memref<4x64xf32, #tpu.memory_space<vmem>>, %arg13: memref<4x512xf32, #tpu.memory_space<vmem>>) attributes {dimension_semantics = [#tpu.dimension_semantics<arbitrary>, #tpu.dimension_semantics<arbitrary>], iteration_bounds = array<i64: 2, 2>, scalar_prefetch = 0 : i64, scratch_operands = 4 : i64, tpu.core_type = #tpu.core_type<tc>, window_params = [{transform_indices = @transform_0, window_bounds = array<i64: 1, 256>}, {transform_indices = @transform_1, window_bounds = array<i64: 256, 1>}, {transform_indices = @transform_2, window_bounds = array<i64: 1, 256>}, {pipeline_mode = #tpu.pipeline_mode<synchronous>, transform_indices = @transform_3, window_bounds = array<i64: 32, 64>}, {pipeline_mode = #tpu.pipeline_mode<synchronous>, transform_indices = @transform_4, window_bounds = array<i64: 32, 32>}, {pipeline_mode = #tpu.pipeline_mode<synchronous>, transform_indices = @transform_5, window_bounds = array<i64: 64, 32>}, {pipeline_mode = #tpu.pipeline_mode<synchronous>, transform_indices = @transform_6, window_bounds = array<i64: 32, 64>}, {pipeline_mode = #tpu.pipeline_mode<synchronous>, transform_indices = @transform_7, window_bounds = array<i64: 4, 512>}]} {
    %c0_i32 = arith.constant 0 : i32
    %0 = arith.cmpi eq, %arg0, %c0_i32 : i32
    %c0_i32_0 = arith.constant 0 : i32
    %1 = arith.cmpi eq, %arg1, %c0_i32_0 : i32
    %2 = arith.andi %0, %1 : i1
    %3 = arith.extui %2 : i1 to i32
    %c0_i32_1 = arith.constant 0 : i32
    %4 = arith.cmpi ne, %3, %c0_i32_1 : i32
    scf.if %4 {
      %c0_13 = arith.constant 0 : index
      %c0_14 = arith.constant 0 : index
      %35 = vector.load %arg6[%c0_13, %c0_14] : memref<32x32xf32, #tpu.memory_space<vmem>>, vector<32x32xf32>
      %c0_15 = arith.constant 0 : index
      %c0_16 = arith.constant 0 : index
      %36 = vector.load %arg5[%c0_15, %c0_16] : memref<32x64xf32, #tpu.memory_space<vmem>>, vector<32x64xf32>
      %cst = arith.constant dense<0.000000e+00> : vector<32x64xf32>
      %37 = tpu.matmul %35, %36, %cst {dimension_numbers = #tpu.dot_dimension_numbers<[1], [0], [0], [1], [0, 0, 1, 1], [], []>} : vector<32x32xf32>, vector<32x64xf32>, vector<32x64xf32> -> vector<32x64xf32>
      %c0_17 = arith.constant 0 : index
      %c0_18 = arith.constant 0 : index
      %38 = vector.load %arg10[%c0_17, %c0_18] : memref<32x64xf32, #tpu.memory_space<vmem>>, vector<32x64xf32>
      tpu.vector_store %arg10[%c0_17, %c0_18], %37 {strides = array<i32>} : memref<32x64xf32, #tpu.memory_space<vmem>>, vector<32x64xf32>,
      %c0_19 = arith.constant 0 : index
      %c0_20 = arith.constant 0 : index
      %39 = vector.load %arg7[%c0_19, %c0_20] : memref<64x32xf32, #tpu.memory_space<vmem>>, vector<64x32xf32>
      %c0_21 = arith.constant 0 : index
      %c0_22 = arith.constant 0 : index
      %40 = vector.load %arg5[%c0_21, %c0_22] : memref<32x64xf32, #tpu.memory_space<vmem>>, vector<32x64xf32>
      %cst_23 = arith.constant dense<0.000000e+00> : vector<64x64xf32>
      %41 = tpu.matmul %39, %40, %cst_23 {dimension_numbers = #tpu.dot_dimension_numbers<[1], [0], [0], [1], [0, 0, 1, 1], [], []>} : vector<64x32xf32>, vector<32x64xf32>, vector<64x64xf32> -> vector<64x64xf32>
      %c0_24 = arith.constant 0 : index
      %c0_25 = arith.constant 0 : index
      %42 = vector.load %arg11[%c0_24, %c0_25] : memref<64x64xf32, #tpu.memory_space<vmem>>, vector<64x64xf32>
      tpu.vector_store %arg11[%c0_24, %c0_25], %41 {strides = array<i32>} : memref<64x64xf32, #tpu.memory_space<vmem>>, vector<64x64xf32>,
      %cst_26 = arith.constant 0.000000e+00 : f32
      %43 = vector.broadcast %cst_26 : f32 to vector<4x64xf32>
      %c0_27 = arith.constant 0 : index
      %c0_28 = arith.constant 0 : index
      %44 = vector.load %arg12[%c0_27, %c0_28] : memref<4x64xf32, #tpu.memory_space<vmem>>, vector<4x64xf32>
      tpu.vector_store %arg12[%c0_27, %c0_28], %43 {strides = array<i32>} : memref<4x64xf32, #tpu.memory_space<vmem>>, vector<4x64xf32>,
    } else {
    }
    %c1_i32 = arith.constant 1 : i32
    %5 = arith.cmpi eq, %arg0, %c1_i32 : i32
    %c0_i32_2 = arith.constant 0 : i32
    %6 = arith.cmpi eq, %arg1, %c0_i32_2 : i32
    %7 = arith.andi %5, %6 : i1
    %8 = arith.extui %7 : i1 to i32
    %c0_i32_3 = arith.constant 0 : i32
    %9 = arith.cmpi ne, %8, %c0_i32_3 : i32
    scf.if %9 {
      %cst = arith.constant 0.000000e+00 : f32
      %35 = vector.broadcast %cst : f32 to vector<32x64xf32>
      %c0_13 = arith.constant 0 : index
      %c0_14 = arith.constant 0 : index
      %36 = vector.load %arg8[%c0_13, %c0_14] : memref<32x64xf32, #tpu.memory_space<vmem>>, vector<32x64xf32>
      tpu.vector_store %arg8[%c0_13, %c0_14], %35 {strides = array<i32>} : memref<32x64xf32, #tpu.memory_space<vmem>>, vector<32x64xf32>,
    } else {
    }
    %c0 = arith.constant 0 : index
    %c0_4 = arith.constant 0 : index
    %10 = vector.load %arg2[%c0, %c0_4] : memref<1x256xi32, #tpu.memory_space<vmem>>, vector<1x256xi32>
    %c0_5 = arith.constant 0 : index
    %c0_6 = arith.constant 0 : index
    %11 = vector.load %arg3[%c0_5, %c0_6] : memref<256x1xi32, #tpu.memory_space<vmem>>, vector<256x1xi32>
    %c0_7 = arith.constant 0 : index
    %c0_8 = arith.constant 0 : index
    %12 = vector.load %arg4[%c0_7, %c0_8] : memref<1x256xi32, #tpu.memory_space<vmem>>, vector<1x256xi32>
    %13 = tpu.iota {dimensions = array<i32: 0>} : vector<64x256xi32>
    %14 = tpu.iota {dimensions = array<i32: 1>} : vector<256x64xi32>
    %15 = vector.broadcast %10 : vector<1x256xi32> to vector<64x256xi32>
    %16 = arith.cmpi eq, %13, %15 : vector<64x256xi32>
    %17 = arith.extui %16 : vector<64x256xi1> to vector<64x256xi32>
    %18 = arith.sitofp %17 : vector<64x256xi32> to vector<64x256xf32>
    %19 = vector.broadcast %12 : vector<1x256xi32> to vector<64x256xi32>
    %20 = arith.cmpi eq, %13, %19 : vector<64x256xi32>
    %21 = arith.extui %20 : vector<64x256xi1> to vector<64x256xi32>
    %22 = arith.sitofp %21 : vector<64x256xi32> to vector<64x256xf32>
    %23 = vector.broadcast %11 : vector<256x1xi32> to vector<256x64xi32>
    %24 = arith.cmpi eq, %23, %14 : vector<256x64xi32>
    %25 = arith.extui %24 : vector<256x64xi1> to vector<256x64xi32>
    %26 = arith.sitofp %25 : vector<256x64xi32> to vector<256x64xf32>
    %c256_i32 = arith.constant 256 : i32
    %27 = arith.muli %arg1, %c256_i32 : i32
    %28 = tpu.assume_multiple %27, 128 : i32
    %c0_i32_9 = arith.constant 0 : i32
    %29 = arith.cmpi eq, %arg0, %c0_i32_9 : i32
    %30 = arith.extui %29 : i1 to i32
    %c0_i32_10 = arith.constant 0 : i32
    %31 = arith.cmpi ne, %30, %c0_i32_10 : i32
    scf.if %31 {
      %c0_13 = arith.constant 0 : index
      %c0_14 = arith.constant 0 : index
      %35 = vector.load %arg10[%c0_13, %c0_14] : memref<32x64xf32, #tpu.memory_space<vmem>>, vector<32x64xf32>
      %cst = arith.constant dense<0.000000e+00> : vector<32x256xf32>
      %36 = tpu.matmul %35, %18, %cst {dimension_numbers = #tpu.dot_dimension_numbers<[1], [0], [0], [1], [0, 0, 1, 1], [], []>} : vector<32x64xf32>, vector<64x256xf32>, vector<32x256xf32> -> vector<32x256xf32>
      %c0_15 = arith.constant 0 : index
      %c0_16 = arith.constant 0 : index
      %37 = vector.load %arg11[%c0_15, %c0_16] : memref<64x64xf32, #tpu.memory_space<vmem>>, vector<32x64xf32>
      %cst_17 = arith.constant dense<0.000000e+00> : vector<32x256xf32>
      %38 = tpu.matmul %37, %22, %cst_17 {dimension_numbers = #tpu.dot_dimension_numbers<[1], [0], [0], [1], [0, 0, 1, 1], [], []>} : vector<32x64xf32>, vector<64x256xf32>, vector<32x256xf32> -> vector<32x256xf32>
      %39 = arith.mulf %36, %38 : vector<32x256xf32>
      %40 = vector.shape_cast %39 : vector<32x256xf32> to vector<4x8x256xf32>
      %cst_18 = arith.constant dense<0.000000e+00> : vector<4x256xf32>
      %41 = vector.multi_reduction <add>, %40, %cst_18 [1] : vector<4x8x256xf32> to vector<4x256xf32>
      %cst_19 = arith.constant -1.000000e+01 : f32
      %cst_20 = arith.constant 1.000000e+01 : f32
      %42 = vector.broadcast %cst_19 : f32 to vector<4x256xf32>
      %43 = arith.maximumf %42, %41 : vector<4x256xf32>
      %44 = vector.broadcast %cst_20 : f32 to vector<4x256xf32>
      %45 = arith.minimumf %44, %43 : vector<4x256xf32>
      %46 = math.exp %45 : vector<4x256xf32>
      %c0_21 = arith.constant 0 : index
      %47 = arith.index_cast %28 : i32 to index
      %48 = vector.load %arg13[%c0_21, %47] : memref<4x512xf32, #tpu.memory_space<vmem>>, vector<4x256xf32>
      tpu.vector_store %arg13[%c0_21, %47], %46 {strides = array<i32>} : memref<4x512xf32, #tpu.memory_space<vmem>>, vector<4x256xf32>,
      %c0_22 = arith.constant 0 : index
      %c0_23 = arith.constant 0 : index
      %49 = vector.load %arg12[%c0_22, %c0_23] : memref<4x64xf32, #tpu.memory_space<vmem>>, vector<4x64xf32>
      %cst_24 = arith.constant dense<0.000000e+00> : vector<4x64xf32>
      %50 = tpu.matmul %46, %26, %cst_24 {dimension_numbers = #tpu.dot_dimension_numbers<[1], [0], [0], [1], [0, 0, 1, 1], [], []>} : vector<4x256xf32>, vector<256x64xf32>, vector<4x64xf32> -> vector<4x64xf32>
      %51 = arith.addf %49, %50 : vector<4x64xf32>
      %c0_25 = arith.constant 0 : index
      %c0_26 = arith.constant 0 : index
      %52 = vector.load %arg12[%c0_25, %c0_26] : memref<4x64xf32, #tpu.memory_space<vmem>>, vector<4x64xf32>
      tpu.vector_store %arg12[%c0_25, %c0_26], %51 {strides = array<i32>} : memref<4x64xf32, #tpu.memory_space<vmem>>, vector<4x64xf32>,
    } else {
    }
    %c1_i32_11 = arith.constant 1 : i32
    %32 = arith.cmpi eq, %arg0, %c1_i32_11 : i32
    %33 = arith.extui %32 : i1 to i32
    %c0_i32_12 = arith.constant 0 : i32
    %34 = arith.cmpi ne, %33, %c0_i32_12 : i32
    scf.if %34 {
      %c32 = arith.constant 32 : index
      %c0_13 = arith.constant 0 : index
      %35 = vector.load %arg11[%c32, %c0_13] : memref<64x64xf32, #tpu.memory_space<vmem>>, vector<32x64xf32>
      %cst = arith.constant dense<0.000000e+00> : vector<32x256xf32>
      %36 = tpu.matmul %35, %22, %cst {dimension_numbers = #tpu.dot_dimension_numbers<[1], [0], [0], [1], [0, 0, 1, 1], [], []>} : vector<32x64xf32>, vector<64x256xf32>, vector<32x256xf32> -> vector<32x256xf32>
      %c0_14 = arith.constant 0 : index
      %c0_15 = arith.constant 0 : index
      %37 = vector.load %arg12[%c0_14, %c0_15] : memref<4x64xf32, #tpu.memory_space<vmem>>, vector<4x64xf32>
      %cst_16 = arith.constant dense<0.000000e+00> : vector<4x256xf32>
      %38 = tpu.matmul %37, %18, %cst_16 {dimension_numbers = #tpu.dot_dimension_numbers<[1], [0], [0], [1], [0, 0, 1, 1], [], []>} : vector<4x64xf32>, vector<64x256xf32>, vector<4x256xf32> -> vector<4x256xf32>
      %c0_17 = arith.constant 0 : index
      %39 = arith.index_cast %28 : i32 to index
      %40 = vector.load %arg13[%c0_17, %39] : memref<4x512xf32, #tpu.memory_space<vmem>>, vector<4x256xf32>
      %cst_18 = arith.constant 9.99999993E-9 : f32
      %41 = vector.broadcast %cst_18 : f32 to vector<4x256xf32>
      %42 = arith.addf %38, %41 : vector<4x256xf32>
      %43 = arith.divf %40, %42 : vector<4x256xf32>
      %c64_i32 = arith.constant 64 : i32
      %44 = vector.broadcast %c64_i32 : i32 to vector<1x256xi32>
      %45 = arith.cmpi slt, %10, %44 : vector<1x256xi32>
      %cst_19 = arith.constant 0.000000e+00 : f32
      %46 = vector.shape_cast %45 : vector<1x256xi1> to vector<1x256xi1>
      %47 = vector.broadcast %46 : vector<1x256xi1> to vector<4x256xi1>
      %48 = vector.broadcast %cst_19 : f32 to vector<4x256xf32>
      %49 = arith.select %47, %43, %48 : vector<4x256xi1>, vector<4x256xf32>
      %c0_20 = arith.constant 0 : index
      %50 = arith.index_cast %28 : i32 to index
      %51 = vector.load %arg9[%c0_20, %50] : memref<4x512xf32, #tpu.memory_space<vmem>>, vector<4x256xf32>
      tpu.vector_store %arg9[%c0_20, %50], %49 {strides = array<i32>} : memref<4x512xf32, #tpu.memory_space<vmem>>, vector<4x256xf32>,
      %52 = vector.shape_cast %49 : vector<4x256xf32> to vector<4x1x256xf32>
      %53 = vector.shape_cast %36 : vector<32x256xf32> to vector<4x8x256xf32>
      %54 = vector.broadcast %52 : vector<4x1x256xf32> to vector<4x8x256xf32>
      %55 = arith.mulf %54, %53 : vector<4x8x256xf32>
      %56 = vector.shape_cast %55 : vector<4x8x256xf32> to vector<32x256xf32>
      %c0_21 = arith.constant 0 : index
      %c0_22 = arith.constant 0 : index
      %57 = vector.load %arg8[%c0_21, %c0_22] : memref<32x64xf32, #tpu.memory_space<vmem>>, vector<32x64xf32>
      %cst_23 = arith.constant dense<0.000000e+00> : vector<32x64xf32>
      %58 = tpu.matmul %56, %26, %cst_23 {dimension_numbers = #tpu.dot_dimension_numbers<[1], [0], [0], [1], [0, 0, 1, 1], [], []>} : vector<32x256xf32>, vector<256x64xf32>, vector<32x64xf32> -> vector<32x64xf32>
      %59 = arith.addf %57, %58 : vector<32x64xf32>
      %c0_24 = arith.constant 0 : index
      %c0_25 = arith.constant 0 : index
      %60 = vector.load %arg8[%c0_24, %c0_25] : memref<32x64xf32, #tpu.memory_space<vmem>>, vector<32x64xf32>
      tpu.vector_store %arg8[%c0_24, %c0_25], %59 {strides = array<i32>} : memref<32x64xf32, #tpu.memory_space<vmem>>, vector<32x64xf32>,
    } else {
    }
    return
  }
  func.func @transform_0(%arg0: i32, %arg1: i32) -> (i32, i32) {
    %c0_i32 = arith.constant 0 : i32
    %c0_i32_0 = arith.constant 0 : i32
    return %c0_i32, %arg1 : i32, i32
  }
  func.func @transform_1(%arg0: i32, %arg1: i32) -> (i32, i32) {
    %c0_i32 = arith.constant 0 : i32
    %c0_i32_0 = arith.constant 0 : i32
    return %arg1, %c0_i32 : i32, i32
  }
  func.func @transform_2(%arg0: i32, %arg1: i32) -> (i32, i32) {
    %c0_i32 = arith.constant 0 : i32
    %c0_i32_0 = arith.constant 0 : i32
    return %c0_i32, %arg1 : i32, i32
  }
  func.func @transform_3(%arg0: i32, %arg1: i32) -> (i32, i32) {
    %c0_i32 = arith.constant 0 : i32
    %c0_i32_0 = arith.constant 0 : i32
    %c0_i32_1 = arith.constant 0 : i32
    return %c0_i32, %c0_i32_0 : i32, i32
  }
  func.func @transform_4(%arg0: i32, %arg1: i32) -> (i32, i32) {
    %c0_i32 = arith.constant 0 : i32
    %c0_i32_0 = arith.constant 0 : i32
    %c0_i32_1 = arith.constant 0 : i32
    return %c0_i32, %c0_i32_0 : i32, i32
  }
  func.func @transform_5(%arg0: i32, %arg1: i32) -> (i32, i32) {
    %c0_i32 = arith.constant 0 : i32
    %c0_i32_0 = arith.constant 0 : i32
    %c0_i32_1 = arith.constant 0 : i32
    return %c0_i32, %c0_i32_0 : i32, i32
  }
  func.func @transform_6(%arg0: i32, %arg1: i32) -> (i32, i32) {
    %c0_i32 = arith.constant 0 : i32
    %c0_i32_0 = arith.constant 0 : i32
    %c0_i32_1 = arith.constant 0 : i32
    return %c0_i32, %c0_i32_0 : i32, i32
  }
  func.func @transform_7(%arg0: i32, %arg1: i32) -> (i32, i32) {
    %c0_i32 = arith.constant 0 : i32
    %c0_i32_0 = arith.constant 0 : i32
    %c0_i32_1 = arith.constant 0 : i32
    return %c0_i32, %c0_i32_0 : i32, i32
  }
}

</mosaic_0001>

<llo_original>
// kernel: tpu_custom_call.1
$region0: #{tpu_custom_call.1}
  #allocation0 [shape = 'u32[]', space=smem, size = 0x4, offset = 0x4, fixed_abs, tag = 'smem constant byte address 0x4 - core index']
  #allocation1 [shape = 'u32[72,128]{1,0:T(1,128)}', space=vmem, size = 0x9000, scoped, tag = 'internal scratch']
  #allocation2 [shape = 'f32[32,64]{1,0:T(8,128)}', space=vmem, size = 0x4000, scoped, tag = 'scratch operand']
  #allocation3 [shape = 'f32[64,64]{1,0:T(8,128)}', space=vmem, size = 0x8000, scoped, tag = 'scratch operand']
  #allocation4 [shape = 'f32[4,64]{1,0:T(4,128)}', space=vmem, size = 0x800, scoped, tag = 'scratch operand']
  #allocation5 [shape = 'f32[4,512]{1,0:T(4,128)}', space=vmem, size = 0x2000, scoped, tag = 'scratch operand']
  %s0 = inlined_call_operand.vmem [shape: s32[1,512], index: 0, kind: input, shape index: {}]
  %s1 = inlined_call_operand.vmem [shape: s32[512,1], index: 1, kind: input, shape index: {}]
  %s2 = inlined_call_operand.vmem [shape: s32[1,512], index: 2, kind: input, shape index: {}]
  %s3 = inlined_call_operand.vmem [shape: f32[32,64], index: 3, kind: input, shape index: {}]
  %s4 = inlined_call_operand.vmem [shape: f32[32,32], index: 4, kind: input, shape index: {}]
  %s5 = inlined_call_operand.vmem [shape: f32[64,32], index: 5, kind: input, shape index: {}]
  %s6 = inlined_call_operand.hbm [shape: f32[32,64], index: 6, kind: output, shape index: {0}]
  %s7 = inlined_call_operand.hbm [shape: f32[4,512], index: 7, kind: output, shape index: {1}]
  %8 = xla_tuple %s6, %s7
  %s9 = sld [smem:[#allocation0]]
  $region81: #{tpu_custom_call.1} parent=0
    _
  %s11 = ssub.s32 1, %s9
  %s12 = scalar_select 0, %s11, %s9
  $region1: #{tpu_custom_call.1} parent=0
    #allocation6 [shape = 'u8[16384]{0}', space=vmem, size = 0x4000, scoped, tag = 'output window, operand 0, single buffered']
    #allocation7 [shape = 's32[2]{0}', space=sflag, size = 0x8, scoped, tag = 'scoped memory for tpu_custom_call.1']
    #allocation8 [shape = 'u8[8192]{0}', space=vmem, size = 0x2000, scoped, tag = 'output window, operand 1, single buffered']
    #allocation9 [shape = 's32[1]{0}', space=sflag, size = 0x4, scoped, tag = 'scoped memory for tpu_custom_call.1']
    %13 = vsyncpa [#allocation7], 0
    %14 = vsyncpa [#allocation9], 0
    loop: start=0, step=1, limit=6
    $region2: #{tpu_custom_call.1} parent=1 // loop_pre_header
      _
    $region3: #{tpu_custom_call.1} parent=1 // loop_header
      %s16 = sphi 0, %s20
      %p17 = scmp.ge.s32.totalorder %s16, 6
      %s23 = sphi 0, %s35
      %s24 = sphi 0, %s31
      %s25 = sphi 0, %s23
      %s26 = sphi 0, %s24
      %s27 = sphi 0, %s25
      %s28 = sphi 0, %s26
      %s38 = sphi 0, %s40
      %s41 = sphi 0, %s38
      %s42 = sphi 0, %s41
      %s58 = sphi 0, %s42
      %s64 = sphi 0, %s66
      %s67 = sphi 0, %s64
      %s68 = sphi 0, %s67
      %s84 = sphi 0, %s68
      %s90 = sphi 0, %s92
      %s93 = sphi 0, %s90
      %s94 = sphi 0, %s93
      %s110 = sphi 0, %s94
      %s114 = sphi 0, %s114
      %s116 = sphi 0, %s114
      %s117 = sphi 0, %s116
      %s131 = sphi 0, %s117
      %s135 = sphi 0, %s135
      %s137 = sphi 0, %s135
      %s138 = sphi 0, %s137
      %s152 = sphi 0, %s138
      %s156 = sphi 0, %s156
      %s158 = sphi 0, %s156
      %s159 = sphi 0, %s158
      %s173 = sphi 0, %s159
      %s177 = sphi 0, %s177
      %s179 = sphi 0, %s177
      %s180 = sphi 0, %s179
      %s194 = sphi 0, %s180
      %s198 = sphi 0, %s198
      %s200 = sphi 0, %s198
      %s201 = sphi 0, %s200
      %s215 = sphi 0, %s201
    $region4: #{tpu_custom_call.1} parent=1 // loop_header_branch
      %19 = sbr.rel (%p17) target = $region8
    $region5: #{tpu_custom_call.1} parent=1 // loop_body
      %s21 = ssub.s32 %s16, 1
      %s22 = ssub.s32 %s16, 2
      %s29 = sadd.s32 1, %s24
      %p30 = scmp.ge.s32.totalorder %s29, 2
      %s31 = scalar_select %p30, 0, %s29
      %s32 = sadd.s32 1, %s23
      %s33 = scalar_select %p30, %s32, %s23
      %p34 = scmp.ge.s32.totalorder %s33, 2
      %s35 = scalar_select %p34, 0, %s33
      %s36 = ssub.s32 %s24, %s31
      %p37 = scmp.eq.s32.totalorder %s36, 0
      %s39 = sadd.s32 %s38, 1
      %s40 = scalar_select %p37, %s38, %s39
      %p43 = pneg %p37
      %p44 = scmp.eq.s32.totalorder %s16, 3
      %p45 = por %p43, %p44
      %p46 = scmp.ne.s32.totalorder %s38, %s41
      %p47 = scmp.eq.s32.totalorder %s16, 0
      %p48 = por %p46, %p47
      %p49 = scmp.ne.s32.totalorder %s38, %s41
      %p50 = scmp.eq.s32.totalorder %s21, 3
      %p51 = por %p49, %p50
      %p52 = scmp.ne.s32.totalorder %s41, %s42
      %p53 = scmp.eq.s32.totalorder %s21, 0
      %p54 = por %p52, %p53
      %p55 = scmp.ne.s32.totalorder %s41, %s42
      %p56 = scmp.eq.s32.totalorder %s22, 3
      %p57 = por %p55, %p56
      %p59 = scmp.ne.s32.totalorder %s42, %s58
      %p60 = scmp.eq.s32.totalorder %s22, 0
      %p61 = por %p59, %p60
      %s62 = ssub.s32 %s24, %s31
      %p63 = scmp.eq.s32.totalorder %s62, 0
      %s65 = sadd.s32 %s64, 1
      %s66 = scalar_select %p63, %s64, %s65
      %p69 = pneg %p63
      %p70 = scmp.eq.s32.totalorder %s16, 3
      %p71 = por %p69, %p70
      %p72 = scmp.ne.s32.totalorder %s64, %s67
      %p73 = scmp.eq.s32.totalorder %s16, 0
      %p74 = por %p72, %p73
      %p75 = scmp.ne.s32.totalorder %s64, %s67
      %p76 = scmp.eq.s32.totalorder %s21, 3
      %p77 = por %p75, %p76
      %p78 = scmp.ne.s32.totalorder %s67, %s68
      %p79 = scmp.eq.s32.totalorder %s21, 0
      %p80 = por %p78, %p79
      %p81 = scmp.ne.s32.totalorder %s67, %s68
      %p82 = scmp.eq.s32.totalorder %s22, 3
      %p83 = por %p81, %p82
      %p85 = scmp.ne.s32.totalorder %s68, %s84
      %p86 = scmp.eq.s32.totalorder %s22, 0
      %p87 = por %p85, %p86
      %s88 = ssub.s32 %s24, %s31
      %p89 = scmp.eq.s32.totalorder %s88, 0
      %s91 = sadd.s32 %s90, 1
      %s92 = scalar_select %p89, %s90, %s91
      %p95 = pneg %p89
      %p96 = scmp.eq.s32.totalorder %s16, 3
      %p97 = por %p95, %p96
      %p98 = scmp.ne.s32.totalorder %s90, %s93
      %p99 = scmp.eq.s32.totalorder %s16, 0
      %p100 = por %p98, %p99
      %p101 = scmp.ne.s32.totalorder %s90, %s93
      %p102 = scmp.eq.s32.totalorder %s21, 3
      %p103 = por %p101, %p102
      %p104 = scmp.ne.s32.totalorder %s93, %s94
      %p105 = scmp.eq.s32.totalorder %s21, 0
      %p106 = por %p104, %p105
      %p107 = scmp.ne.s32.totalorder %s93, %s94
      %p108 = scmp.eq.s32.totalorder %s22, 3
      %p109 = por %p107, %p108
      %p111 = scmp.ne.s32.totalorder %s94, %s110
      %p112 = scmp.eq.s32.totalorder %s22, 0
      %p113 = por %p111, %p112
      %s115 = sadd.s32 %s114, 1
      %p118 = scmp.eq.s32.totalorder %s16, 3
      %p119 = scmp.ne.s32.totalorder %s114, %s116
      %p120 = scmp.eq.s32.totalorder %s16, 0
      %p121 = por %p119, %p120
      %p122 = scmp.ne.s32.totalorder %s114, %s116
      %p123 = scmp.eq.s32.totalorder %s21, 3
      %p124 = por %p122, %p123
      %p125 = scmp.ne.s32.totalorder %s116, %s117
      %p126 = scmp.eq.s32.totalorder %s21, 0
      %p127 = por %p125, %p126
      %p128 = scmp.ne.s32.totalorder %s116, %s117
      %p129 = scmp.eq.s32.totalorder %s22, 3
      %p130 = por %p128, %p129
      %p132 = scmp.ne.s32.totalorder %s117, %s131
      %p133 = scmp.eq.s32.totalorder %s22, 0
      %p134 = por %p132, %p133
      %s136 = sadd.s32 %s135, 1
      %p139 = scmp.eq.s32.totalorder %s16, 3
      %p140 = scmp.ne.s32.totalorder %s135, %s137
      %p141 = scmp.eq.s32.totalorder %s16, 0
      %p142 = por %p140, %p141
      %p143 = scmp.ne.s32.totalorder %s135, %s137
      %p144 = scmp.eq.s32.totalorder %s21, 3
      %p145 = por %p143, %p144
      %p146 = scmp.ne.s32.totalorder %s137, %s138
      %p147 = scmp.eq.s32.totalorder %s21, 0
      %p148 = por %p146, %p147
      %p149 = scmp.ne.s32.totalorder %s137, %s138
      %p150 = scmp.eq.s32.totalorder %s22, 3
      %p151 = por %p149, %p150
      %p153 = scmp.ne.s32.totalorder %s138, %s152
      %p154 = scmp.eq.s32.totalorder %s22, 0
      %p155 = por %p153, %p154
      %s157 = sadd.s32 %s156, 1
      %p160 = scmp.eq.s32.totalorder %s16, 3
      %p161 = scmp.ne.s32.totalorder %s156, %s158
      %p162 = scmp.eq.s32.totalorder %s16, 0
      %p163 = por %p161, %p162
      %p164 = scmp.ne.s32.totalorder %s156, %s158
      %p165 = scmp.eq.s32.totalorder %s21, 3
      %p166 = por %p164, %p165
      %p167 = scmp.ne.s32.totalorder %s158, %s159
      %p168 = scmp.eq.s32.totalorder %s21, 0
      %p169 = por %p167, %p168
      %p170 = scmp.ne.s32.totalorder %s158, %s159
      %p171 = scmp.eq.s32.totalorder %s22, 3
      %p172 = por %p170, %p171
      %p174 = scmp.ne.s32.totalorder %s159, %s173
      %p175 = scmp.eq.s32.totalorder %s22, 0
      %p176 = por %p174, %p175
      %s178 = sadd.s32 %s177, 1
      %p181 = scmp.eq.s32.totalorder %s16, 3
      %p182 = scmp.ne.s32.totalorder %s177, %s179
      %p183 = scmp.eq.s32.totalorder %s16, 0
      %p184 = por %p182, %p183
      %p185 = scmp.ne.s32.totalorder %s177, %s179
      %p186 = scmp.eq.s32.totalorder %s21, 3
      %p187 = por %p185, %p186
      %p188 = scmp.ne.s32.totalorder %s179, %s180
      %p189 = scmp.eq.s32.totalorder %s21, 0
      %p190 = por %p188, %p189
      %p191 = scmp.ne.s32.totalorder %s179, %s180
      %p192 = scmp.eq.s32.totalorder %s22, 3
      %p193 = por %p191, %p192
      %p195 = scmp.ne.s32.totalorder %s180, %s194
      %p196 = scmp.eq.s32.totalorder %s22, 0
      %p197 = por %p195, %p196
      %s199 = sadd.s32 %s198, 1
      %p202 = scmp.eq.s32.totalorder %s16, 3
      %p203 = scmp.ne.s32.totalorder %s198, %s200
      %p204 = scmp.eq.s32.totalorder %s16, 0
      %p205 = por %p203, %p204
      %p206 = scmp.ne.s32.totalorder %s198, %s200
      %p207 = scmp.eq.s32.totalorder %s21, 3
      %p208 = por %p206, %p207
      %p209 = scmp.ne.s32.totalorder %s200, %s201
      %p210 = scmp.eq.s32.totalorder %s21, 0
      %p211 = por %p209, %p210
      %p212 = scmp.ne.s32.totalorder %s200, %s201
      %p213 = scmp.eq.s32.totalorder %s22, 3
      %p214 = por %p212, %p213
      %p216 = scmp.ne.s32.totalorder %s201, %s215
      %p217 = scmp.eq.s32.totalorder %s22, 0
      %p218 = por %p216, %p217
      %p219 = scmp.le.s32.totalorder 1, %s16
      %p220 = scmp.lt.s32.totalorder %s16, 5
      %p221 = pnand %p219, %p220
      %p222 = pneg %p221
      // Predicated region
      $region9: #{tpu_custom_call.1} parent=5 // pred_check
        _
      $region10: #{tpu_custom_call.1} parent=5 // pred_check_branch
        %224 = sbr.rel (%p221) target = $region12
      $region11: #{tpu_custom_call.1} parent=5 // pred_region
        %s225 = ssub.s32 %s16, 1
        // Predicated region
        $region13: #{tpu_custom_call.1} parent=11 // pred_check
          %p226 = pneg %p127
        $region14: #{tpu_custom_call.1} parent=11 // pred_check_branch
          %228 = sbr.rel (%p226) target = $region16
        $region15: #{tpu_custom_call.1} parent=11 // pred_region
          _
        $region16: #{tpu_custom_call.1} parent=11 // pred_fallthru
          _
        // Predicated region
        $region17: #{tpu_custom_call.1} parent=11 // pred_check
          %p229 = pneg %p148
        $region18: #{tpu_custom_call.1} parent=11 // pred_check_branch
          %231 = sbr.rel (%p229) target = $region20
        $region19: #{tpu_custom_call.1} parent=11 // pred_region
          _
        $region20: #{tpu_custom_call.1} parent=11 // pred_fallthru
          _
        // Predicated region
        $region21: #{tpu_custom_call.1} parent=11 // pred_check
          %p232 = pneg %p169
        $region22: #{tpu_custom_call.1} parent=11 // pred_check_branch
          %234 = sbr.rel (%p232) target = $region24
        $region23: #{tpu_custom_call.1} parent=11 // pred_region
          _
        $region24: #{tpu_custom_call.1} parent=11 // pred_fallthru
          _
      $region12: #{tpu_custom_call.1} parent=5 // pred_fallthru
        _
      %p235 = scmp.lt.s32.totalorder %s16, 4
      // Predicated region
      $region25: #{tpu_custom_call.1} parent=5 // pred_check
        %p236 = pneg %p235
      $region26: #{tpu_custom_call.1} parent=5 // pred_check_branch
        %238 = sbr.rel (%p236) target = $region28
      $region27: #{tpu_custom_call.1} parent=5 // pred_region
        // Predicated region
        $region29: #{tpu_custom_call.1} parent=27 // pred_check
          %p239 = pneg %p48
        $region30: #{tpu_custom_call.1} parent=27 // pred_check_branch
          %241 = sbr.rel (%p239) target = $region32
        $region31: #{tpu_custom_call.1} parent=27 // pred_region
          %s242 = smul.u32 2, %s24
          %p243 = scmp.lt.s32.totalorder %s242, 3
          %s244 = scalar_select %p243, %s242, 3
          %s245 = scalar_lea.vmem %s0, %s244
          %s246 = smul.u32 2, %s24
        $region32: #{tpu_custom_call.1} parent=27 // pred_fallthru
          _
        // Predicated region
        $region33: #{tpu_custom_call.1} parent=27 // pred_check
          %p247 = pneg %p74
        $region34: #{tpu_custom_call.1} parent=27 // pred_check_branch
          %249 = sbr.rel (%p247) target = $region36
        $region35: #{tpu_custom_call.1} parent=27 // pred_region
          %s250 = smul.u32 32, %s24
          %p251 = scmp.lt.s32.totalorder %s250, 63
          %s252 = scalar_select %p251, %s250, 63
          %s253 = smul.addr %s252, 8
          %s254 = scalar_lea.vmem %s1, %s253
          %s255 = smul.u32 32, %s24
        $region36: #{tpu_custom_call.1} parent=27 // pred_fallthru
          _
        // Predicated region
        $region37: #{tpu_custom_call.1} parent=27 // pred_check
          %p256 = pneg %p100
        $region38: #{tpu_custom_call.1} parent=27 // pred_check_branch
          %258 = sbr.rel (%p256) target = $region40
        $region39: #{tpu_custom_call.1} parent=27 // pred_region
          %s259 = smul.u32 2, %s24
          %p260 = scmp.lt.s32.totalorder %s259, 3
          %s261 = scalar_select %p260, %s259, 3
          %s262 = scalar_lea.vmem %s2, %s261
          %s263 = smul.u32 2, %s24
        $region40: #{tpu_custom_call.1} parent=27 // pred_fallthru
          _
      $region28: #{tpu_custom_call.1} parent=5 // pred_fallthru
        _
      %p264 = scmp.le.s32.totalorder 1, %s16
      %p265 = scmp.lt.s32.totalorder %s16, 5
      %p266 = pnand %p264, %p265
      %p267 = pneg %p266
      // Predicated region
      $region41: #{tpu_custom_call.1} parent=5 // pred_check
        _
      $region42: #{tpu_custom_call.1} parent=5 // pred_check_branch
        %269 = sbr.rel (%p266) target = $region44
      $region43: #{tpu_custom_call.1} parent=5 // pred_region
        %s270 = ssub.s32 %s16, 1
        %s271 = smul.u32 2, %s26
        %p272 = scmp.lt.s32.totalorder %s271, 3
        %s273 = scalar_select %p272, %s271, 3
        %s274 = scalar_lea.vmem %s0, %s273
        %p275 = pneg %p54
        %p276 = pneg %p51
        %s277 = smul.u32 32, %s26
        %p278 = scmp.lt.s32.totalorder %s277, 63
        %s279 = scalar_select %p278, %s277, 63
        %s280 = smul.addr %s279, 8
        %s281 = scalar_lea.vmem %s1, %s280
        %p282 = pneg %p80
        %p283 = pneg %p77
        %s284 = smul.u32 2, %s26
        %p285 = scmp.lt.s32.totalorder %s284, 3
        %s286 = scalar_select %p285, %s284, 3
        %s287 = scalar_lea.vmem %s2, %s286
        %p288 = pneg %p106
        %p289 = pneg %p103
        %p290 = pneg %p127
        %p291 = pneg %p124
        %p292 = pneg %p148
        %p293 = pneg %p145
        %p294 = pneg %p169
        %p295 = pneg %p166
        %p296 = pneg %p190
        %p297 = pneg %p187
        %p298 = pneg %p211
        %p299 = pneg %p208
        %s300 = smul.u32 2, %s26
        %p301 = scmp.lt.s32.totalorder %s300, 3
        %s302 = scalar_select %p301, %s300, 3
        %s303 = scalar_lea.vmem %s0, %s302
        %s304 = smul.u32 2, %s26
        %s305 = smul.u32 32, %s26
        %p306 = scmp.lt.s32.totalorder %s305, 63
        %s307 = scalar_select %p306, %s305, 63
        %s308 = smul.addr %s307, 8
        %s309 = scalar_lea.vmem %s1, %s308
        %s310 = smul.u32 32, %s26
        %s311 = smul.u32 2, %s26
        %p312 = scmp.lt.s32.totalorder %s311, 3
        %s313 = scalar_select %p312, %s311, 3
        %s314 = scalar_lea.vmem %s2, %s313
        %s315 = smul.u32 2, %s26
        %p316 = scmp.eq.s32.totalorder %s25, 0
        %p317 = scmp.eq.s32.totalorder %s26, 0
        %p318 = pnand %p316, %p317
        %p319 = pneg %p318
        // Predicated region
        $region45: #{tpu_custom_call.1} parent=43 // pred_check
          _
        $region46: #{tpu_custom_call.1} parent=43 // pred_check_branch
          %321 = sbr.rel (%p318) target = $region48
        $region47: #{tpu_custom_call.1} parent=43 // pred_region
          %v322 = vld [vmem:[%s4] sm:$0xff]
          %v323 = vld [vmem:[%s4 + $0x8] sm:$0xff]
          %v324 = vld [vmem:[%s4 + $0x10] sm:$0xff]
          %v325 = vld [vmem:[%s4 + $0x18] sm:$0xff]
          %v326 = vld [vmem:[%s3] sm:$0xff]
          %v327 = vld [vmem:[%s3 + $0x8] sm:$0xff]
          %v328 = vld [vmem:[%s3 + $0x10] sm:$0xff]
          %v329 = vld [vmem:[%s3 + $0x18] sm:$0xff]
          %vm330 = vcmask 261120
          %v332 = vsel %vm330, %v322, 0
          %v335 = vsel %vm330, %v323, 0
          %v338 = vsel %vm330, %v324, 0
          %v341 = vsel %vm330, %v325, 0
          %343 = vmatpush.msra.mxu0 0.0
          %344 = vmatpush.msra.mxu0 0.0
          %345 = vmatpush.msra.mxu0 0.0
          %346 = vmatpush.msra.mxu0 0.0
          %347 = vmatpush.msra.mxu0 0.0
          %348 = vmatpush.msra.mxu0 0.0
          %349 = vmatpush.msra.mxu0 0.0
          %350 = vmatpush.msra.mxu0 0.0
          %351 = vmatpush.msra.mxu0 0.0
          %352 = vmatpush.msra.mxu0 0.0
          %353 = vmatpush.msra.mxu0 0.0
          %354 = vmatpush.msra.mxu0 0.0
          %355 = vmatpush.msra.mxu0 %v329
          %356 = vmatpush.msra.mxu0 %v328
          %357 = vmatpush.msra.mxu0 %v327
          %358 = vmatpush.msra.mxu0 %v326
          %359 = vmatmul.f32.gmra.mxu0 %v332
          %v360 = vpop.f32.mrf.mxu0
          %v361 = vadd.f32 0.0, %v360
          %362 = vmatmul.f32.gmra.mxu0 %v335
          %v363 = vpop.f32.mrf.mxu0
          %v364 = vadd.f32 0.0, %v363
          %365 = vmatmul.f32.gmra.mxu0 %v338
          %v366 = vpop.f32.mrf.mxu0
          %v367 = vadd.f32 0.0, %v366
          %368 = vmatmul.f32.gmra.mxu0 %v341
          %v369 = vpop.f32.mrf.mxu0
          %v370 = vadd.f32 0.0, %v369
          %371 = vdwg.mxu0
          %vm372 = vcmask 523264
          %373 = vst.msk [vmem:[#allocation2] sm:$0xff] %vm372, %v361
          %374 = vst.msk [vmem:[#allocation2 + $0x8] sm:$0xff] %vm372, %v364
          %375 = vst.msk [vmem:[#allocation2 + $0x10] sm:$0xff] %vm372, %v367
          %376 = vst.msk [vmem:[#allocation2 + $0x18] sm:$0xff] %vm372, %v370
          %v377 = vld [vmem:[%s5] sm:$0xff]
          %v378 = vld [vmem:[%s5 + $0x8] sm:$0xff]
          %v379 = vld [vmem:[%s5 + $0x10] sm:$0xff]
          %v380 = vld [vmem:[%s5 + $0x18] sm:$0xff]
          %v381 = vld [vmem:[%s5 + $0x20] sm:$0xff]
          %v382 = vld [vmem:[%s5 + $0x28] sm:$0xff]
          %v383 = vld [vmem:[%s5 + $0x30] sm:$0xff]
          %v384 = vld [vmem:[%s5 + $0x38] sm:$0xff]
          %v385 = vld [vmem:[%s3] sm:$0xff]
          %v386 = vld [vmem:[%s3 + $0x8] sm:$0xff]
          %v387 = vld [vmem:[%s3 + $0x10] sm:$0xff]
          %v388 = vld [vmem:[%s3 + $0x18] sm:$0xff]
          %v390 = vsel %vm330, %v377, 0
          %v393 = vsel %vm330, %v378, 0
          %v396 = vsel %vm330, %v379, 0
          %v399 = vsel %vm330, %v380, 0
          %v402 = vsel %vm330, %v381, 0
          %v405 = vsel %vm330, %v382, 0
          %v408 = vsel %vm330, %v383, 0
          %v411 = vsel %vm330, %v384, 0
          %413 = vmatpush.msra.mxu0 0.0
          %414 = vmatpush.msra.mxu0 0.0
          %415 = vmatpush.msra.mxu0 0.0
          %416 = vmatpush.msra.mxu0 0.0
          %417 = vmatpush.msra.mxu0 0.0
          %418 = vmatpush.msra.mxu0 0.0
          %419 = vmatpush.msra.mxu0 0.0
          %420 = vmatpush.msra.mxu0 0.0
          %421 = vmatpush.msra.mxu0 0.0
          %422 = vmatpush.msra.mxu0 0.0
          %423 = vmatpush.msra.mxu0 0.0
          %424 = vmatpush.msra.mxu0 0.0
          %425 = vmatpush.msra.mxu0 %v388
          %426 = vmatpush.msra.mxu0 %v387
          %427 = vmatpush.msra.mxu0 %v386
          %428 = vmatpush.msra.mxu0 %v385
          %429 = vmatmul.f32.gmra.mxu0 %v390
          %v430 = vpop.f32.mrf.mxu0
          %v431 = vadd.f32 0.0, %v430
          %432 = vmatmul.f32.gmra.mxu0 %v393
          %v433 = vpop.f32.mrf.mxu0
          %v434 = vadd.f32 0.0, %v433
          %435 = vmatmul.f32.gmra.mxu0 %v396
          %v436 = vpop.f32.mrf.mxu0
          %v437 = vadd.f32 0.0, %v436
          %438 = vmatmul.f32.gmra.mxu0 %v399
          %v439 = vpop.f32.mrf.mxu0
          %v440 = vadd.f32 0.0, %v439
          %441 = vmatmul.f32.gmra.mxu0 %v402
          %v442 = vpop.f32.mrf.mxu0
          %v443 = vadd.f32 0.0, %v442
          %444 = vmatmul.f32.gmra.mxu0 %v405
          %v445 = vpop.f32.mrf.mxu0
          %v446 = vadd.f32 0.0, %v445
          %447 = vmatmul.f32.gmra.mxu0 %v408
          %v448 = vpop.f32.mrf.mxu0
          %v449 = vadd.f32 0.0, %v448
          %450 = vmatmul.f32.gmra.mxu0 %v411
          %v451 = vpop.f32.mrf.mxu0
          %v452 = vadd.f32 0.0, %v451
          %453 = vdwg.mxu0
          %454 = vst.msk [vmem:[#allocation3] sm:$0xff] %vm372, %v431
          %455 = vst.msk [vmem:[#allocation3 + $0x8] sm:$0xff] %vm372, %v434
          %456 = vst.msk [vmem:[#allocation3 + $0x10] sm:$0xff] %vm372, %v437
          %457 = vst.msk [vmem:[#allocation3 + $0x18] sm:$0xff] %vm372, %v440
          %458 = vst.msk [vmem:[#allocation3 + $0x20] sm:$0xff] %vm372, %v443
          %459 = vst.msk [vmem:[#allocation3 + $0x28] sm:$0xff] %vm372, %v446
          %460 = vst.msk [vmem:[#allocation3 + $0x30] sm:$0xff] %vm372, %v449
          %461 = vst.msk [vmem:[#allocation3 + $0x38] sm:$0xff] %vm372, %v452
          %vm462 = vcmask 519168
          %463 = vst.msk [vmem:[#allocation4] sm:$0xf] %vm462, 0.0
        $region48: #{tpu_custom_call.1} parent=43 // pred_fallthru
          _
        %p464 = scmp.eq.s32.totalorder %s25, 1
        %p465 = pnand %p464, %p317
        %p466 = pneg %p465
        // Predicated region
        $region49: #{tpu_custom_call.1} parent=43 // pred_check
          _
        $region50: #{tpu_custom_call.1} parent=43 // pred_check_branch
          %468 = sbr.rel (%p465) target = $region52
        $region51: #{tpu_custom_call.1} parent=43 // pred_region
          %vm469 = vcmask 523264
          %470 = vst.msk [vmem:[#allocation6] sm:$0xff] %vm469, 0.0
          %471 = vst.msk [vmem:[#allocation6 + $0x8] sm:$0xff] %vm469, 0.0
          %472 = vst.msk [vmem:[#allocation6 + $0x10] sm:$0xff] %vm469, 0.0
          %473 = vst.msk [vmem:[#allocation6 + $0x18] sm:$0xff] %vm469, 0.0
        $region52: #{tpu_custom_call.1} parent=43 // pred_fallthru
          _
        %v474 = vld [vmem:[%s303] sm:$0x3]
        %v475 = vld [vmem:[%s309] sm:$0xff]
        %v476 = vld [vmem:[%s309 + $0x8] sm:$0xff]
        %v477 = vld [vmem:[%s309 + $0x10] sm:$0xff]
        %v478 = vld [vmem:[%s309 + $0x18] sm:$0xff]
        %v479 = vld [vmem:[%s309 + $0x20] sm:$0xff]
        %v480 = vld [vmem:[%s309 + $0x28] sm:$0xff]
        %v481 = vld [vmem:[%s309 + $0x30] sm:$0xff]
        %v482 = vld [vmem:[%s309 + $0x38] sm:$0xff]
        %v483 = vld [vmem:[%s309 + $0x40] sm:$0xff]
        %v484 = vld [vmem:[%s309 + $0x48] sm:$0xff]
        %v485 = vld [vmem:[%s309 + $0x50] sm:$0xff]
        %v486 = vld [vmem:[%s309 + $0x58] sm:$0xff]
        %v487 = vld [vmem:[%s309 + $0x60] sm:$0xff]
        %v488 = vld [vmem:[%s309 + $0x68] sm:$0xff]
        %v489 = vld [vmem:[%s309 + $0x70] sm:$0xff]
        %v490 = vld [vmem:[%s309 + $0x78] sm:$0xff]
        %v491 = vld [vmem:[%s309 + $0x80] sm:$0xff]
        %v492 = vld [vmem:[%s309 + $0x88] sm:$0xff]
        %v493 = vld [vmem:[%s309 + $0x90] sm:$0xff]
        %v494 = vld [vmem:[%s309 + $0x98] sm:$0xff]
        %v495 = vld [vmem:[%s309 + $0xa0] sm:$0xff]
        %v496 = vld [vmem:[%s309 + $0xa8] sm:$0xff]
        %v497 = vld [vmem:[%s309 + $0xb0] sm:$0xff]
        %v498 = vld [vmem:[%s309 + $0xb8] sm:$0xff]
        %v499 = vld [vmem:[%s309 + $0xc0] sm:$0xff]
        %v500 = vld [vmem:[%s309 + $0xc8] sm:$0xff]
        %v501 = vld [vmem:[%s309 + $0xd0] sm:$0xff]
        %v502 = vld [vmem:[%s309 + $0xd8] sm:$0xff]
        %v503 = vld [vmem:[%s309 + $0xe0] sm:$0xff]
        %v504 = vld [vmem:[%s309 + $0xe8] sm:$0xff]
        %v505 = vld [vmem:[%s309 + $0xf0] sm:$0xff]
        %v506 = vld [vmem:[%s309 + $0xf8] sm:$0xff]
        %v507 = vld [vmem:[%s314] sm:$0x3]
        %v508 = vlaneseq
        %v509 = vshrl.u32 %v508, 7
        %v510 = vadd.s32 %v509, 8
        %v511 = vadd.s32 %v509, 16
        %v512 = vadd.s32 %v509, 24
        %v513 = vadd.s32 %v509, 32
        %v514 = vadd.s32 %v509, 40
        %v515 = vadd.s32 %v509, 48
        %v516 = vadd.s32 %v509, 56
        %v517 = vlaneseq
        %v518 = vand.u32 %v517, 127
        %v519 = vperm.slane %v474, 0
        %v520 = vperm.slane %v474, 1
        %vm521 = vcmp.eq.s32.totalorder %v509, %v519
        %vm522 = vcmp.eq.s32.totalorder %v509, %v520
        %vm523 = vcmp.eq.s32.totalorder %v510, %v519
        %vm524 = vcmp.eq.s32.totalorder %v510, %v520
        %vm525 = vcmp.eq.s32.totalorder %v511, %v519
        %vm526 = vcmp.eq.s32.totalorder %v511, %v520
        %vm527 = vcmp.eq.s32.totalorder %v512, %v519
        %vm528 = vcmp.eq.s32.totalorder %v512, %v520
        %vm529 = vcmp.eq.s32.totalorder %v513, %v519
        %vm530 = vcmp.eq.s32.totalorder %v513, %v520
        %vm531 = vcmp.eq.s32.totalorder %v514, %v519
        %vm532 = vcmp.eq.s32.totalorder %v514, %v520
        %vm533 = vcmp.eq.s32.totalorder %v515, %v519
        %vm534 = vcmp.eq.s32.totalorder %v515, %v520
        %vm535 = vcmp.eq.s32.totalorder %v516, %v519
        %vm536 = vcmp.eq.s32.totalorder %v516, %v520
        %v537 = vsel %vm521, 1, 0
        %v538 = vsel %vm522, 1, 0
        %v539 = vsel %vm523, 1, 0
        %v540 = vsel %vm524, 1, 0
        %v541 = vsel %vm525, 1, 0
        %v542 = vsel %vm526, 1, 0
        %v543 = vsel %vm527, 1, 0
        %v544 = vsel %vm528, 1, 0
        %v545 = vsel %vm529, 1, 0
        %v546 = vsel %vm530, 1, 0
        %v547 = vsel %vm531, 1, 0
        %v548 = vsel %vm532, 1, 0
        %v549 = vsel %vm533, 1, 0
        %v550 = vsel %vm534, 1, 0
        %v551 = vsel %vm535, 1, 0
        %v552 = vsel %vm536, 1, 0
        %v553 = vcvt.s32.f32 %v537
        %v554 = vcvt.s32.f32 %v538
        %v555 = vcvt.s32.f32 %v539
        %v556 = vcvt.s32.f32 %v540
        %v557 = vcvt.s32.f32 %v541
        %v558 = vcvt.s32.f32 %v542
        %v559 = vcvt.s32.f32 %v543
        %v560 = vcvt.s32.f32 %v544
        %v561 = vcvt.s32.f32 %v545
        %v562 = vcvt.s32.f32 %v546
        %v563 = vcvt.s32.f32 %v547
        %v564 = vcvt.s32.f32 %v548
        %v565 = vcvt.s32.f32 %v549
        %v566 = vcvt.s32.f32 %v550
        %v567 = vcvt.s32.f32 %v551
        %v568 = vcvt.s32.f32 %v552
        %v569 = vperm.slane %v507, 0
        %v570 = vperm.slane %v507, 1
        %vm571 = vcmp.eq.s32.totalorder %v509, %v569
        %vm572 = vcmp.eq.s32.totalorder %v509, %v570
        %vm573 = vcmp.eq.s32.totalorder %v510, %v569
        %vm574 = vcmp.eq.s32.totalorder %v510, %v570
        %vm575 = vcmp.eq.s32.totalorder %v511, %v569
        %vm576 = vcmp.eq.s32.totalorder %v511, %v570
        %vm577 = vcmp.eq.s32.totalorder %v512, %v569
        %vm578 = vcmp.eq.s32.totalorder %v512, %v570
        %vm579 = vcmp.eq.s32.totalorder %v513, %v569
        %vm580 = vcmp.eq.s32.totalorder %v513, %v570
        %vm581 = vcmp.eq.s32.totalorder %v514, %v569
        %vm582 = vcmp.eq.s32.totalorder %v514, %v570
        %vm583 = vcmp.eq.s32.totalorder %v515, %v569
        %vm584 = vcmp.eq.s32.totalorder %v515, %v570
        %vm585 = vcmp.eq.s32.totalorder %v516, %v569
        %vm586 = vcmp.eq.s32.totalorder %v516, %v570
        %v587 = vsel %vm571, 1, 0
        %v588 = vsel %vm572, 1, 0
        %v589 = vsel %vm573, 1, 0
        %v590 = vsel %vm574, 1, 0
        %v591 = vsel %vm575, 1, 0
        %v592 = vsel %vm576, 1, 0
        %v593 = vsel %vm577, 1, 0
        %v594 = vsel %vm578, 1, 0
        %v595 = vsel %vm579, 1, 0
        %v596 = vsel %vm580, 1, 0
        %v597 = vsel %vm581, 1, 0
        %v598 = vsel %vm582, 1, 0
        %v599 = vsel %vm583, 1, 0
        %v600 = vsel %vm584, 1, 0
        %v601 = vsel %vm585, 1, 0
        %v602 = vsel %vm586, 1, 0
        %v603 = vcvt.s32.f32 %v587
        %v604 = vcvt.s32.f32 %v588
        %v605 = vcvt.s32.f32 %v589
        %v606 = vcvt.s32.f32 %v590
        %v607 = vcvt.s32.f32 %v591
        %v608 = vcvt.s32.f32 %v592
        %v609 = vcvt.s32.f32 %v593
        %v610 = vcvt.s32.f32 %v594
        %v611 = vcvt.s32.f32 %v595
        %v612 = vcvt.s32.f32 %v596
        %v613 = vcvt.s32.f32 %v597
        %v614 = vcvt.s32.f32 %v598
        %v615 = vcvt.s32.f32 %v599
        %v616 = vcvt.s32.f32 %v600
        %v617 = vcvt.s32.f32 %v601
        %v618 = vcvt.s32.f32 %v602
        %619 = vset.pattern.permute.xlu0 0
        %620 = vperm.xlu0 %619, %v475
        %v621 = vpop.permute.xlu0 %620
        %622 = vset.pattern.permute.xlu0 0
        %623 = vperm.xlu0 %622, %v476
        %v624 = vpop.permute.xlu0 %623
        %625 = vset.pattern.permute.xlu0 0
        %626 = vperm.xlu0 %625, %v477
        %v627 = vpop.permute.xlu0 %626
        %628 = vset.pattern.permute.xlu0 0
        %629 = vperm.xlu0 %628, %v478
        %v630 = vpop.permute.xlu0 %629
        %631 = vset.pattern.permute.xlu0 0
        %632 = vperm.xlu0 %631, %v479
        %v633 = vpop.permute.xlu0 %632
        %634 = vset.pattern.permute.xlu0 0
        %635 = vperm.xlu0 %634, %v480
        %v636 = vpop.permute.xlu0 %635
        %637 = vset.pattern.permute.xlu0 0
        %638 = vperm.xlu0 %637, %v481
        %v639 = vpop.permute.xlu0 %638
        %640 = vset.pattern.permute.xlu0 0
        %641 = vperm.xlu0 %640, %v482
        %v642 = vpop.permute.xlu0 %641
        %643 = vset.pattern.permute.xlu0 0
        %644 = vperm.xlu0 %643, %v483
        %v645 = vpop.permute.xlu0 %644
        %646 = vset.pattern.permute.xlu0 0
        %647 = vperm.xlu0 %646, %v484
        %v648 = vpop.permute.xlu0 %647
        %649 = vset.pattern.permute.xlu0 0
        %650 = vperm.xlu0 %649, %v485
        %v651 = vpop.permute.xlu0 %650
        %652 = vset.pattern.permute.xlu0 0
        %653 = vperm.xlu0 %652, %v486
        %v654 = vpop.permute.xlu0 %653
        %655 = vset.pattern.permute.xlu0 0
        %656 = vperm.xlu0 %655, %v487
        %v657 = vpop.permute.xlu0 %656
        %658 = vset.pattern.permute.xlu0 0
        %659 = vperm.xlu0 %658, %v488
        %v660 = vpop.permute.xlu0 %659
        %661 = vset.pattern.permute.xlu0 0
        %662 = vperm.xlu0 %661, %v489
        %v663 = vpop.permute.xlu0 %662
        %664 = vset.pattern.permute.xlu0 0
        %665 = vperm.xlu0 %664, %v490
        %v666 = vpop.permute.xlu0 %665
        %667 = vset.pattern.permute.xlu0 0
        %668 = vperm.xlu0 %667, %v491
        %v669 = vpop.permute.xlu0 %668
        %670 = vset.pattern.permute.xlu0 0
        %671 = vperm.xlu0 %670, %v492
        %v672 = vpop.permute.xlu0 %671
        %673 = vset.pattern.permute.xlu0 0
        %674 = vperm.xlu0 %673, %v493
        %v675 = vpop.permute.xlu0 %674
        %676 = vset.pattern.permute.xlu0 0
        %677 = vperm.xlu0 %676, %v494
        %v678 = vpop.permute.xlu0 %677
        %679 = vset.pattern.permute.xlu0 0
        %680 = vperm.xlu0 %679, %v495
        %v681 = vpop.permute.xlu0 %680
        %682 = vset.pattern.permute.xlu0 0
        %683 = vperm.xlu0 %682, %v496
        %v684 = vpop.permute.xlu0 %683
        %685 = vset.pattern.permute.xlu0 0
        %686 = vperm.xlu0 %685, %v497
        %v687 = vpop.permute.xlu0 %686
        %688 = vset.pattern.permute.xlu0 0
        %689 = vperm.xlu0 %688, %v498
        %v690 = vpop.permute.xlu0 %689
        %691 = vset.pattern.permute.xlu0 0
        %692 = vperm.xlu0 %691, %v499
        %v693 = vpop.permute.xlu0 %692
        %694 = vset.pattern.permute.xlu0 0
        %695 = vperm.xlu0 %694, %v500
        %v696 = vpop.permute.xlu0 %695
        %697 = vset.pattern.permute.xlu0 0
        %698 = vperm.xlu0 %697, %v501
        %v699 = vpop.permute.xlu0 %698
        %700 = vset.pattern.permute.xlu0 0
        %701 = vperm.xlu0 %700, %v502
        %v702 = vpop.permute.xlu0 %701
        %703 = vset.pattern.permute.xlu0 0
        %704 = vperm.xlu0 %703, %v503
        %v705 = vpop.permute.xlu0 %704
        %706 = vset.pattern.permute.xlu0 0
        %707 = vperm.xlu0 %706, %v504
        %v708 = vpop.permute.xlu0 %707
        %709 = vset.pattern.permute.xlu0 0
        %710 = vperm.xlu0 %709, %v505
        %v711 = vpop.permute.xlu0 %710
        %712 = vset.pattern.permute.xlu0 0
        %713 = vperm.xlu0 %712, %v506
        %v714 = vpop.permute.xlu0 %713
        %vm715 = vcmp.eq.s32.totalorder %v621, %v518
        %vm716 = vcmp.eq.s32.totalorder %v624, %v518
        %vm717 = vcmp.eq.s32.totalorder %v627, %v518
        %vm718 = vcmp.eq.s32.totalorder %v630, %v518
        %vm719 = vcmp.eq.s32.totalorder %v633, %v518
        %vm720 = vcmp.eq.s32.totalorder %v636, %v518
        %vm721 = vcmp.eq.s32.totalorder %v639, %v518
        %vm722 = vcmp.eq.s32.totalorder %v642, %v518
        %vm723 = vcmp.eq.s32.totalorder %v645, %v518
        %vm724 = vcmp.eq.s32.totalorder %v648, %v518
        %vm725 = vcmp.eq.s32.totalorder %v651, %v518
        %vm726 = vcmp.eq.s32.totalorder %v654, %v518
        %vm727 = vcmp.eq.s32.totalorder %v657, %v518
        %vm728 = vcmp.eq.s32.totalorder %v660, %v518
        %vm729 = vcmp.eq.s32.totalorder %v663, %v518
        %vm730 = vcmp.eq.s32.totalorder %v666, %v518
        %vm731 = vcmp.eq.s32.totalorder %v669, %v518
        %vm732 = vcmp.eq.s32.totalorder %v672, %v518
        %vm733 = vcmp.eq.s32.totalorder %v675, %v518
        %vm734 = vcmp.eq.s32.totalorder %v678, %v518
        %vm735 = vcmp.eq.s32.totalorder %v681, %v518
        %vm736 = vcmp.eq.s32.totalorder %v684, %v518
        %vm737 = vcmp.eq.s32.totalorder %v687, %v518
        %vm738 = vcmp.eq.s32.totalorder %v690, %v518
        %vm739 = vcmp.eq.s32.totalorder %v693, %v518
        %vm740 = vcmp.eq.s32.totalorder %v696, %v518
        %vm741 = vcmp.eq.s32.totalorder %v699, %v518
        %vm742 = vcmp.eq.s32.totalorder %v702, %v518
        %vm743 = vcmp.eq.s32.totalorder %v705, %v518
        %vm744 = vcmp.eq.s32.totalorder %v708, %v518
        %vm745 = vcmp.eq.s32.totalorder %v711, %v518
        %vm746 = vcmp.eq.s32.totalorder %v714, %v518
        %v747 = vsel %vm715, 1, 0
        %v748 = vsel %vm716, 1, 0
        %v749 = vsel %vm717, 1, 0
        %v750 = vsel %vm718, 1, 0
        %v751 = vsel %vm719, 1, 0
        %v752 = vsel %vm720, 1, 0
        %v753 = vsel %vm721, 1, 0
        %v754 = vsel %vm722, 1, 0
        %v755 = vsel %vm723, 1, 0
        %v756 = vsel %vm724, 1, 0
        %v757 = vsel %vm725, 1, 0
        %v758 = vsel %vm726, 1, 0
        %v759 = vsel %vm727, 1, 0
        %v760 = vsel %vm728, 1, 0
        %v761 = vsel %vm729, 1, 0
        %v762 = vsel %vm730, 1, 0
        %v763 = vsel %vm731, 1, 0
        %v764 = vsel %vm732, 1, 0
        %v765 = vsel %vm733, 1, 0
        %v766 = vsel %vm734, 1, 0
        %v767 = vsel %vm735, 1, 0
        %v768 = vsel %vm736, 1, 0
        %v769 = vsel %vm737, 1, 0
        %v770 = vsel %vm738, 1, 0
        %v771 = vsel %vm739, 1, 0
        %v772 = vsel %vm740, 1, 0
        %v773 = vsel %vm741, 1, 0
        %v774 = vsel %vm742, 1, 0
        %v775 = vsel %vm743, 1, 0
        %v776 = vsel %vm744, 1, 0
        %v777 = vsel %vm745, 1, 0
        %v778 = vsel %vm746, 1, 0
        %v779 = vcvt.s32.f32 %v747
        %v780 = vcvt.s32.f32 %v748
        %v781 = vcvt.s32.f32 %v749
        %v782 = vcvt.s32.f32 %v750
        %v783 = vcvt.s32.f32 %v751
        %v784 = vcvt.s32.f32 %v752
        %v785 = vcvt.s32.f32 %v753
        %v786 = vcvt.s32.f32 %v754
        %v787 = vcvt.s32.f32 %v755
        %v788 = vcvt.s32.f32 %v756
        %v789 = vcvt.s32.f32 %v757
        %v790 = vcvt.s32.f32 %v758
        %v791 = vcvt.s32.f32 %v759
        %v792 = vcvt.s32.f32 %v760
        %v793 = vcvt.s32.f32 %v761
        %v794 = vcvt.s32.f32 %v762
        %v795 = vcvt.s32.f32 %v763
        %v796 = vcvt.s32.f32 %v764
        %v797 = vcvt.s32.f32 %v765
        %v798 = vcvt.s32.f32 %v766
        %v799 = vcvt.s32.f32 %v767
        %v800 = vcvt.s32.f32 %v768
        %v801 = vcvt.s32.f32 %v769
        %v802 = vcvt.s32.f32 %v770
        %v803 = vcvt.s32.f32 %v771
        %v804 = vcvt.s32.f32 %v772
        %v805 = vcvt.s32.f32 %v773
        %v806 = vcvt.s32.f32 %v774
        %v807 = vcvt.s32.f32 %v775
        %v808 = vcvt.s32.f32 %v776
        %v809 = vcvt.s32.f32 %v777
        %v810 = vcvt.s32.f32 %v778
        %s811 = smul.u32 %s26, 256
        // Predicated region
        $region53: #{tpu_custom_call.1} parent=43 // pred_check
          %p812 = pneg %p316
        $region54: #{tpu_custom_call.1} parent=43 // pred_check_branch
          %814 = sbr.rel (%p812) target = $region56
        $region55: #{tpu_custom_call.1} parent=43 // pred_region
          %v815 = vld [vmem:[#allocation2] sm:$0xff]
          %v816 = vld [vmem:[#allocation2 + $0x8] sm:$0xff]
          %v817 = vld [vmem:[#allocation2 + $0x10] sm:$0xff]
          %v818 = vld [vmem:[#allocation2 + $0x18] sm:$0xff]
          %vm819 = vcmask 523264
          %v821 = vsel %vm819, %v815, 0
          %v824 = vsel %vm819, %v816, 0
          %v827 = vsel %vm819, %v817, 0
          %v830 = vsel %vm819, %v818, 0
          %832 = vmatpush.msra.mxu0 0.0
          %833 = vmatpush.msra.mxu0 0.0
          %834 = vmatpush.msra.mxu0 0.0
          %835 = vmatpush.msra.mxu0 0.0
          %836 = vmatpush.msra.mxu0 0.0
          %837 = vmatpush.msra.mxu0 0.0
          %838 = vmatpush.msra.mxu0 0.0
          %839 = vmatpush.msra.mxu0 0.0
          %840 = vmatpush.msra.mxu0 %v567
          %841 = vmatpush.msra.mxu0 %v565
          %842 = vmatpush.msra.mxu0 %v563
          %843 = vmatpush.msra.mxu0 %v561
          %844 = vmatpush.msra.mxu0 %v559
          %845 = vmatpush.msra.mxu0 %v557
          %846 = vmatpush.msra.mxu0 %v555
          %847 = vmatpush.msra.mxu0 %v553
          %848 = vmatmul.f32.gmra.mxu0 %v821
          %v849 = vpop.f32.mrf.mxu0
          %v850 = vadd.f32 0.0, %v849
          %851 = vmatmul.f32.gmra.mxu0 %v824
          %v852 = vpop.f32.mrf.mxu0
          %v853 = vadd.f32 0.0, %v852
          %854 = vmatmul.f32.gmra.mxu0 %v827
          %v855 = vpop.f32.mrf.mxu0
          %v856 = vadd.f32 0.0, %v855
          %857 = vmatmul.f32.gmra.mxu0 %v830
          %v858 = vpop.f32.mrf.mxu0
          %v859 = vadd.f32 0.0, %v858
          %860 = vdwg.mxu0
          %861 = vmatpush.msra.mxu0 0.0
          %862 = vmatpush.msra.mxu0 0.0
          %863 = vmatpush.msra.mxu0 0.0
          %864 = vmatpush.msra.mxu0 0.0
          %865 = vmatpush.msra.mxu0 0.0
          %866 = vmatpush.msra.mxu0 0.0
          %867 = vmatpush.msra.mxu0 0.0
          %868 = vmatpush.msra.mxu0 0.0
          %869 = vmatpush.msra.mxu0 %v568
          %870 = vmatpush.msra.mxu0 %v566
          %871 = vmatpush.msra.mxu0 %v564
          %872 = vmatpush.msra.mxu0 %v562
          %873 = vmatpush.msra.mxu0 %v560
          %874 = vmatpush.msra.mxu0 %v558
          %875 = vmatpush.msra.mxu0 %v556
          %876 = vmatpush.msra.mxu0 %v554
          %877 = vmatmul.f32.gmra.mxu0 %v821
          %v878 = vpop.f32.mrf.mxu0
          %v879 = vadd.f32 0.0, %v878
          %880 = vmatmul.f32.gmra.mxu0 %v824
          %v881 = vpop.f32.mrf.mxu0
          %v882 = vadd.f32 0.0, %v881
          %883 = vmatmul.f32.gmra.mxu0 %v827
          %v884 = vpop.f32.mrf.mxu0
          %v885 = vadd.f32 0.0, %v884
          %886 = vmatmul.f32.gmra.mxu0 %v830
          %v887 = vpop.f32.mrf.mxu0
          %v888 = vadd.f32 0.0, %v887
          %889 = vdwg.mxu0
          %v890 = vld [vmem:[#allocation3] sm:$0xff]
          %v891 = vld [vmem:[#allocation3 + $0x8] sm:$0xff]
          %v892 = vld [vmem:[#allocation3 + $0x10] sm:$0xff]
          %v893 = vld [vmem:[#allocation3 + $0x18] sm:$0xff]
          %v895 = vsel %vm819, %v890, 0
          %v898 = vsel %vm819, %v891, 0
          %v901 = vsel %vm819, %v892, 0
          %v904 = vsel %vm819, %v893, 0
          %906 = vmatpush.msra.mxu0 0.0
          %907 = vmatpush.msra.mxu0 0.0
          %908 = vmatpush.msra.mxu0 0.0
          %909 = vmatpush.msra.mxu0 0.0
          %910 = vmatpush.msra.mxu0 0.0
          %911 = vmatpush.msra.mxu0 0.0
          %912 = vmatpush.msra.mxu0 0.0
          %913 = vmatpush.msra.mxu0 0.0
          %914 = vmatpush.msra.mxu0 %v617
          %915 = vmatpush.msra.mxu0 %v615
          %916 = vmatpush.msra.mxu0 %v613
          %917 = vmatpush.msra.mxu0 %v611
          %918 = vmatpush.msra.mxu0 %v609
          %919 = vmatpush.msra.mxu0 %v607
          %920 = vmatpush.msra.mxu0 %v605
          %921 = vmatpush.msra.mxu0 %v603
          %922 = vmatmul.f32.gmra.mxu0 %v895
          %v923 = vpop.f32.mrf.mxu0
          %v924 = vadd.f32 0.0, %v923
          %925 = vmatmul.f32.gmra.mxu0 %v898
          %v926 = vpop.f32.mrf.mxu0
          %v927 = vadd.f32 0.0, %v926
          %928 = vmatmul.f32.gmra.mxu0 %v901
          %v929 = vpop.f32.mrf.mxu0
          %v930 = vadd.f32 0.0, %v929
          %931 = vmatmul.f32.gmra.mxu0 %v904
          %v932 = vpop.f32.mrf.mxu0
          %v933 = vadd.f32 0.0, %v932
          %934 = vdwg.mxu0
          %935 = vmatpush.msra.mxu0 0.0
          %936 = vmatpush.msra.mxu0 0.0
          %937 = vmatpush.msra.mxu0 0.0
          %938 = vmatpush.msra.mxu0 0.0
          %939 = vmatpush.msra.mxu0 0.0
          %940 = vmatpush.msra.mxu0 0.0
          %941 = vmatpush.msra.mxu0 0.0
          %942 = vmatpush.msra.mxu0 0.0
          %943 = vmatpush.msra.mxu0 %v618
          %944 = vmatpush.msra.mxu0 %v616
          %945 = vmatpush.msra.mxu0 %v614
          %946 = vmatpush.msra.mxu0 %v612
          %947 = vmatpush.msra.mxu0 %v610
          %948 = vmatpush.msra.mxu0 %v608
          %949 = vmatpush.msra.mxu0 %v606
          %950 = vmatpush.msra.mxu0 %v604
          %951 = vmatmul.f32.gmra.mxu0 %v895
          %v952 = vpop.f32.mrf.mxu0
          %v953 = vadd.f32 0.0, %v952
          %954 = vmatmul.f32.gmra.mxu0 %v898
          %v955 = vpop.f32.mrf.mxu0
          %v956 = vadd.f32 0.0, %v955
          %957 = vmatmul.f32.gmra.mxu0 %v901
          %v958 = vpop.f32.mrf.mxu0
          %v959 = vadd.f32 0.0, %v958
          %960 = vmatmul.f32.gmra.mxu0 %v904
          %v961 = vpop.f32.mrf.mxu0
          %v962 = vadd.f32 0.0, %v961
          %963 = vdwg.mxu0
          %v964 = vmul.f32 %v850, %v924
          %v965 = vmul.f32 %v879, %v953
          %v966 = vmul.f32 %v853, %v927
          %v967 = vmul.f32 %v882, %v956
          %v968 = vmul.f32 %v856, %v930
          %v969 = vmul.f32 %v885, %v959
          %v970 = vmul.f32 %v859, %v933
          %v971 = vmul.f32 %v888, %v962
          %v972 = vrot.slane %v964, 4
          %v973 = vadd.f32 %v964, %v972
          %v974 = vrot.slane %v973, 2
          %v975 = vadd.f32 %v973, %v974
          %v976 = vrot.slane %v975, 1
          %v977 = vadd.f32 %v975, %v976
          %v978 = vrot.slane %v965, 4
          %v979 = vadd.f32 %v965, %v978
          %v980 = vrot.slane %v979, 2
          %v981 = vadd.f32 %v979, %v980
          %v982 = vrot.slane %v981, 1
          %v983 = vadd.f32 %v981, %v982
          %v984 = vrot.slane %v966, 4
          %v985 = vadd.f32 %v966, %v984
          %v986 = vrot.slane %v985, 2
          %v987 = vadd.f32 %v985, %v986
          %v988 = vrot.slane %v987, 1
          %v989 = vadd.f32 %v987, %v988
          %v990 = vrot.slane %v967, 4
          %v991 = vadd.f32 %v967, %v990
          %v992 = vrot.slane %v991, 2
          %v993 = vadd.f32 %v991, %v992
          %v994 = vrot.slane %v993, 1
          %v995 = vadd.f32 %v993, %v994
          %v996 = vrot.slane %v968, 4
          %v997 = vadd.f32 %v968, %v996
          %v998 = vrot.slane %v997, 2
          %v999 = vadd.f32 %v997, %v998
          %v1000 = vrot.slane %v999, 1
          %v1001 = vadd.f32 %v999, %v1000
          %v1002 = vrot.slane %v969, 4
          %v1003 = vadd.f32 %v969, %v1002
          %v1004 = vrot.slane %v1003, 2
          %v1005 = vadd.f32 %v1003, %v1004
          %v1006 = vrot.slane %v1005, 1
          %v1007 = vadd.f32 %v1005, %v1006
          %v1008 = vrot.slane %v970, 4
          %v1009 = vadd.f32 %v970, %v1008
          %v1010 = vrot.slane %v1009, 2
          %v1011 = vadd.f32 %v1009, %v1010
          %v1012 = vrot.slane %v1011, 1
          %v1013 = vadd.f32 %v1011, %v1012
          %v1014 = vrot.slane %v971, 4
          %v1015 = vadd.f32 %v971, %v1014
          %v1016 = vrot.slane %v1015, 2
          %v1017 = vadd.f32 %v1015, %v1016
          %v1018 = vrot.slane %v1017, 1
          %v1019 = vadd.f32 %v1017, %v1018
          %v1020 = vmax.f32 %v977, -10.0
          %v1021 = vmax.f32 %v983, -10.0
          %v1022 = vmax.f32 %v989, -10.0
          %v1023 = vmax.f32 %v995, -10.0
          %v1024 = vmax.f32 %v1001, -10.0
          %v1025 = vmax.f32 %v1007, -10.0
          %v1026 = vmax.f32 %v1013, -10.0
          %v1027 = vmax.f32 %v1019, -10.0
          %v1028 = vmin.f32 %v1020, 10.0
          %v1029 = vmin.f32 %v1021, 10.0
          %v1030 = vmin.f32 %v1022, 10.0
          %v1031 = vmin.f32 %v1023, 10.0
          %v1032 = vmin.f32 %v1024, 10.0
          %v1033 = vmin.f32 %v1025, 10.0
          %v1034 = vmin.f32 %v1026, 10.0
          %v1035 = vmin.f32 %v1027, 10.0
          %v1036 = vmul.f32 %v1028, 1.442695
          %v1037 = vpow.pop %v1036
          %v1038 = vmul.f32 %v1029, 1.442695
          %v1039 = vpow.pop %v1038
          %v1040 = vmul.f32 %v1030, 1.442695
          %v1041 = vpow.pop %v1040
          %v1042 = vmul.f32 %v1031, 1.442695
          %v1043 = vpow.pop %v1042
          %v1044 = vmul.f32 %v1032, 1.442695
          %v1045 = vpow.pop %v1044
          %v1046 = vmul.f32 %v1033, 1.442695
          %v1047 = vpow.pop %v1046
          %v1048 = vmul.f32 %v1034, 1.442695
          %v1049 = vpow.pop %v1048
          %v1050 = vmul.f32 %v1035, 1.442695
          %v1051 = vpow.pop %v1050
          %v1060 = vrot.slane %v1039, 4
          %v1061 = vrot.slane %v1043, 4
          %v1062 = vrot.slane %v1047, 4
          %v1063 = vrot.slane %v1051, 4
          %vm1064 = vcmask 1043456
          %v1065 = vsel %vm1064, %v1037, %v1060
          %v1066 = vsel %vm1064, %v1041, %v1061
          %v1067 = vsel %vm1064, %v1045, %v1062
          %v1068 = vsel %vm1064, %v1049, %v1063
          %v1069 = vrot.slane %v1066, 7
          %vm1070 = vcmask 1041409
          %v1071 = vsel %vm1070, %v1069, %v1065
          %vm1072 = vcmask 1045509
          %v1073 = vsel %vm1072, %v1069, %v1071
          %v1074 = vrot.slane %v1067, 6
          %vm1075 = vcmask 1042434
          %v1076 = vsel %vm1075, %v1074, %v1073
          %vm1077 = vcmask 1046534
          %v1078 = vsel %vm1077, %v1074, %v1076
          %v1079 = vrot.slane %v1068, 5
          %vm1080 = vcmask 1043459
          %v1081 = vsel %vm1080, %v1079, %v1078
          %vm1082 = vcmask 1047559
          %v1083 = vsel %vm1082, %v1079, %v1081
          %s1085 = sshra.s32 %s811, 7
          %s1086 = sand.u32 %s811, 127
          %s1087 = smul.addr %s1085, 4
          %s1088 = scalar_lea.vmem [#allocation5], %s1087
          %1089 = vst [vmem:[%s1088] sm:$0xff] %v1083
          %v1090 = vld [vmem:[#allocation4] sm:$0xf]
          %v1091 = vsel %vm1070, %v1041, %v1037
          %v1092 = vsel %vm1075, %v1045, %v1091
          %v1093 = vsel %vm1080, %v1049, %v1092
          %v1094 = vsel %vm1070, %v1043, %v1039
          %v1095 = vsel %vm1075, %v1047, %v1094
          %v1096 = vsel %vm1080, %v1051, %v1095
          %1099 = vmatpush.msra.mxu0 %v794
          %1100 = vmatpush.msra.mxu0 %v793
          %1101 = vmatpush.msra.mxu0 %v792
          %1102 = vmatpush.msra.mxu0 %v791
          %1103 = vmatpush.msra.mxu0 %v790
          %1104 = vmatpush.msra.mxu0 %v789
          %1105 = vmatpush.msra.mxu0 %v788
          %1106 = vmatpush.msra.mxu0 %v787
          %1107 = vmatpush.msra.mxu0 %v786
          %1108 = vmatpush.msra.mxu0 %v785
          %1109 = vmatpush.msra.mxu0 %v784
          %1110 = vmatpush.msra.mxu0 %v783
          %1111 = vmatpush.msra.mxu0 %v782
          %1112 = vmatpush.msra.mxu0 %v781
          %1113 = vmatpush.msra.mxu0 %v780
          %1114 = vmatpush.msra.mxu0 %v779
          %1115 = vmatmul.f32.gmra.mxu0 %v1093
          %v1116 = vpop.f32.mrf.mxu0
          %v1117 = vadd.f32 0.0, %v1116
          %1118 = vdwg.mxu0
          %1119 = vmatpush.msra.mxu0 %v810
          %1120 = vmatpush.msra.mxu0 %v809
          %1121 = vmatpush.msra.mxu0 %v808
          %1122 = vmatpush.msra.mxu0 %v807
          %1123 = vmatpush.msra.mxu0 %v806
          %1124 = vmatpush.msra.mxu0 %v805
          %1125 = vmatpush.msra.mxu0 %v804
          %1126 = vmatpush.msra.mxu0 %v803
          %1127 = vmatpush.msra.mxu0 %v802
          %1128 = vmatpush.msra.mxu0 %v801
          %1129 = vmatpush.msra.mxu0 %v800
          %1130 = vmatpush.msra.mxu0 %v799
          %1131 = vmatpush.msra.mxu0 %v798
          %1132 = vmatpush.msra.mxu0 %v797
          %1133 = vmatpush.msra.mxu0 %v796
          %1134 = vmatpush.msra.mxu0 %v795
          %1135 = vmatmul.f32.gmra.mxu0 %v1096
          %v1136 = vpop.f32.mrf.mxu0
          %v1137 = vadd.f32 %v1117, %v1136
          %1138 = vdwg.mxu0
          %v1139 = vadd.f32 %v1090, %v1137
          %vm1140 = vcmask 519168
          %1141 = vst.msk [vmem:[#allocation4] sm:$0xf] %vm1140, %v1139
        $region56: #{tpu_custom_call.1} parent=43 // pred_fallthru
          _
        // Predicated region
        $region57: #{tpu_custom_call.1} parent=43 // pred_check
          %p1142 = pneg %p464
        $region58: #{tpu_custom_call.1} parent=43 // pred_check_branch
          %1144 = sbr.rel (%p1142) target = $region60
        $region59: #{tpu_custom_call.1} parent=43 // pred_region
          %v1145 = vld [vmem:[#allocation3 + $0x20] sm:$0xff]
          %v1146 = vld [vmem:[#allocation3 + $0x28] sm:$0xff]
          %v1147 = vld [vmem:[#allocation3 + $0x30] sm:$0xff]
          %v1148 = vld [vmem:[#allocation3 + $0x38] sm:$0xff]
          %vm1149 = vcmask 523264
          %v1151 = vsel %vm1149, %v1145, 0
          %v1154 = vsel %vm1149, %v1146, 0
          %v1157 = vsel %vm1149, %v1147, 0
          %v1160 = vsel %vm1149, %v1148, 0
          %1162 = vmatpush.msra.mxu0 0.0
          %1163 = vmatpush.msra.mxu0 0.0
          %1164 = vmatpush.msra.mxu0 0.0
          %1165 = vmatpush.msra.mxu0 0.0
          %1166 = vmatpush.msra.mxu0 0.0
          %1167 = vmatpush.msra.mxu0 0.0
          %1168 = vmatpush.msra.mxu0 0.0
          %1169 = vmatpush.msra.mxu0 0.0
          %1170 = vmatpush.msra.mxu0 %v617
          %1171 = vmatpush.msra.mxu0 %v615
          %1172 = vmatpush.msra.mxu0 %v613
          %1173 = vmatpush.msra.mxu0 %v611
          %1174 = vmatpush.msra.mxu0 %v609
          %1175 = vmatpush.msra.mxu0 %v607
          %1176 = vmatpush.msra.mxu0 %v605
          %1177 = vmatpush.msra.mxu0 %v603
          %1178 = vmatmul.f32.gmra.mxu0 %v1151
          %v1179 = vpop.f32.mrf.mxu0
          %v1180 = vadd.f32 0.0, %v1179
          %1181 = vmatmul.f32.gmra.mxu0 %v1154
          %v1182 = vpop.f32.mrf.mxu0
          %v1183 = vadd.f32 0.0, %v1182
          %1184 = vmatmul.f32.gmra.mxu0 %v1157
          %v1185 = vpop.f32.mrf.mxu0
          %v1186 = vadd.f32 0.0, %v1185
          %1187 = vmatmul.f32.gmra.mxu0 %v1160
          %v1188 = vpop.f32.mrf.mxu0
          %v1189 = vadd.f32 0.0, %v1188
          %1190 = vdwg.mxu0
          %1191 = vmatpush.msra.mxu0 0.0
          %1192 = vmatpush.msra.mxu0 0.0
          %1193 = vmatpush.msra.mxu0 0.0
          %1194 = vmatpush.msra.mxu0 0.0
          %1195 = vmatpush.msra.mxu0 0.0
          %1196 = vmatpush.msra.mxu0 0.0
          %1197 = vmatpush.msra.mxu0 0.0
          %1198 = vmatpush.msra.mxu0 0.0
          %1199 = vmatpush.msra.mxu0 %v618
          %1200 = vmatpush.msra.mxu0 %v616
          %1201 = vmatpush.msra.mxu0 %v614
          %1202 = vmatpush.msra.mxu0 %v612
          %1203 = vmatpush.msra.mxu0 %v610
          %1204 = vmatpush.msra.mxu0 %v608
          %1205 = vmatpush.msra.mxu0 %v606
          %1206 = vmatpush.msra.mxu0 %v604
          %1207 = vmatmul.f32.gmra.mxu0 %v1151
          %v1208 = vpop.f32.mrf.mxu0
          %v1209 = vadd.f32 0.0, %v1208
          %1210 = vmatmul.f32.gmra.mxu0 %v1154
          %v1211 = vpop.f32.mrf.mxu0
          %v1212 = vadd.f32 0.0, %v1211
          %1213 = vmatmul.f32.gmra.mxu0 %v1157
          %v1214 = vpop.f32.mrf.mxu0
          %v1215 = vadd.f32 0.0, %v1214
          %1216 = vmatmul.f32.gmra.mxu0 %v1160
          %v1217 = vpop.f32.mrf.mxu0
          %v1218 = vadd.f32 0.0, %v1217
          %1219 = vdwg.mxu0
          %v1220 = vld [vmem:[#allocation4] sm:$0xf]
          %s1221 = sshra.s32 %s811, 7
          %s1222 = sand.u32 %s811, 127
          %s1223 = smul.addr %s1221, 4
          %s1224 = scalar_lea.vmem [#allocation5], %s1223
          %v1225 = vld [vmem:[%s1224] sm:$0xff]
          %v1227 = vsel %vm1149, %v1220, 0
          %1229 = vmatpush.msra.mxu0 0.0
          %1230 = vmatpush.msra.mxu0 0.0
          %1231 = vmatpush.msra.mxu0 0.0
          %1232 = vmatpush.msra.mxu0 0.0
          %1233 = vmatpush.msra.mxu0 0.0
          %1234 = vmatpush.msra.mxu0 0.0
          %1235 = vmatpush.msra.mxu0 0.0
          %1236 = vmatpush.msra.mxu0 0.0
          %1237 = vmatpush.msra.mxu0 %v567
          %1238 = vmatpush.msra.mxu0 %v565
          %1239 = vmatpush.msra.mxu0 %v563
          %1240 = vmatpush.msra.mxu0 %v561
          %1241 = vmatpush.msra.mxu0 %v559
          %1242 = vmatpush.msra.mxu0 %v557
          %1243 = vmatpush.msra.mxu0 %v555
          %1244 = vmatpush.msra.mxu0 %v553
          %1245 = vmatmul.f32.gmra.mxu0 %v1227
          %v1246 = vpop.f32.mrf.mxu0
          %v1247 = vadd.f32 1e-08, %v1246
          %1248 = vdwg.mxu0
          %1249 = vmatpush.msra.mxu0 0.0
          %1250 = vmatpush.msra.mxu0 0.0
          %1251 = vmatpush.msra.mxu0 0.0
          %1252 = vmatpush.msra.mxu0 0.0
          %1253 = vmatpush.msra.mxu0 0.0
          %1254 = vmatpush.msra.mxu0 0.0
          %1255 = vmatpush.msra.mxu0 0.0
          %1256 = vmatpush.msra.mxu0 0.0
          %1257 = vmatpush.msra.mxu0 %v568
          %1258 = vmatpush.msra.mxu0 %v566
          %1259 = vmatpush.msra.mxu0 %v564
          %1260 = vmatpush.msra.mxu0 %v562
          %1261 = vmatpush.msra.mxu0 %v560
          %1262 = vmatpush.msra.mxu0 %v558
          %1263 = vmatpush.msra.mxu0 %v556
          %1264 = vmatpush.msra.mxu0 %v554
          %1265 = vmatmul.f32.gmra.mxu0 %v1227
          %v1266 = vpop.f32.mrf.mxu0
          %v1267 = vadd.f32 1e-08, %v1266
          %1268 = vdwg.mxu0
          %v1271 = vrot.slane %v1267, 4
          %vm1272 = vcmask 1043456
          %v1273 = vsel %vm1272, %v1247, %v1271
          %v1275 = vrcp.pop %v1273
          %v1276 = vmul.f32 %v1273, %v1275
          %v1277 = vsub.f32 1.0, %v1276
          %v1278 = vmul.f32 %v1275, %v1277
          %v1279 = vadd.f32 %v1275, %v1278
          %vm1280 = vweird.f32 %v1273
          %vm1281 = vweird.f32 %v1275
          %vm1282 = vmor %vm1280, %vm1281
          %v1283 = vsel %vm1282, %v1275, %v1279
          %v1284 = vand.u32 2147483647, %v1273
          %vm1285 = vcmp.eq.f32.partialorder %v1284, 8.507059e+37
          %v1286 = vand.u32 %v1273, 2147483648
          %v1287 = vor.u32 1.1754944e-38, %v1286
          %v1288 = vsel %vm1285, %v1287, %v1283
          %v1289 = vmul.f32 %v1225, %v1288
          %vm1290 = vcmp.lt.s32.totalorder %v474, 64
          %v1291 = vsel %vm1290, 1, 0
          %v1292 = vperm.slane %v1291, 0
          %v1293 = vperm.slane %v1291, 1
          %vm1294 = vcmp.eq.s32.totalorder %v1292, 1
          %vm1295 = vcmp.eq.s32.totalorder %v1293, 1
          %1297 = vst [vmem:[#allocation1] ss:$2 sm:$0xff] %v1289
          %v1298 = vld.sshfl [vmem:[#allocation1] sm:$0xff pattern:$0x75316420]
          %v1299 = vld.sshfl [vmem:[#allocation1 + $0x8] sm:$0xff pattern:$0x75316420]
          %v1302 = vsel %vm1294, %v1298, 0.0
          %v1303 = vsel %vm1295, %v1299, 0.0
          %v1306 = vrot.slane %v1303, 4
          %v1307 = vsel %vm1272, %v1302, %v1306
          %s1309 = smul.addr %s1221, 4
          %s1310 = scalar_lea.vmem [#allocation8], %s1309
          %1311 = vst [vmem:[%s1310] sm:$0xff] %v1307
          %v1312 = vrot.slane %v1303, 7
          %vm1313 = vcmask 1040384
          %v1314 = vsel %vm1313, %v1302, %v1312
          %vm1315 = vcmask 1041409
          %v1316 = vsel %vm1315, %v1302, %v1312
          %v1317 = vrot.slane %v1316, 1
          %vm1318 = vcmask 1042434
          %v1319 = vsel %vm1318, %v1302, %v1312
          %v1320 = vrot.slane %v1319, 2
          %vm1321 = vcmask 1043459
          %v1322 = vsel %vm1321, %v1302, %v1312
          %v1323 = vrot.slane %v1322, 3
          %v1324 = vperm.slane %v1314, 0
          %v1325 = vperm.slane %v1314, 1
          %v1326 = vperm.slane %v1317, 0
          %v1327 = vperm.slane %v1317, 1
          %v1328 = vperm.slane %v1320, 0
          %v1329 = vperm.slane %v1320, 1
          %v1330 = vperm.slane %v1323, 0
          %v1331 = vperm.slane %v1323, 1
          %v1340 = vmul.f32 %v1324, %v1180
          %v1341 = vmul.f32 %v1325, %v1209
          %v1342 = vmul.f32 %v1326, %v1183
          %v1343 = vmul.f32 %v1327, %v1212
          %v1344 = vmul.f32 %v1328, %v1186
          %v1345 = vmul.f32 %v1329, %v1215
          %v1346 = vmul.f32 %v1330, %v1189
          %v1347 = vmul.f32 %v1331, %v1218
          %v1348 = vld [vmem:[#allocation6] sm:$0xff]
          %v1349 = vld [vmem:[#allocation6 + $0x8] sm:$0xff]
          %v1350 = vld [vmem:[#allocation6 + $0x10] sm:$0xff]
          %v1351 = vld [vmem:[#allocation6 + $0x18] sm:$0xff]
          %1352 = vmatpush.msra.mxu0 %v794
          %1353 = vmatpush.msra.mxu0 %v793
          %1354 = vmatpush.msra.mxu0 %v792
          %1355 = vmatpush.msra.mxu0 %v791
          %1356 = vmatpush.msra.mxu0 %v790
          %1357 = vmatpush.msra.mxu0 %v789
          %1358 = vmatpush.msra.mxu0 %v788
          %1359 = vmatpush.msra.mxu0 %v787
          %1360 = vmatpush.msra.mxu0 %v786
          %1361 = vmatpush.msra.mxu0 %v785
          %1362 = vmatpush.msra.mxu0 %v784
          %1363 = vmatpush.msra.mxu0 %v783
          %1364 = vmatpush.msra.mxu0 %v782
          %1365 = vmatpush.msra.mxu0 %v781
          %1366 = vmatpush.msra.mxu0 %v780
          %1367 = vmatpush.msra.mxu0 %v779
          %1368 = vmatmul.f32.gmra.mxu0 %v1340
          %v1369 = vpop.f32.mrf.mxu0
          %v1370 = vadd.f32 0.0, %v1369
          %1371 = vmatmul.f32.gmra.mxu0 %v1342
          %v1372 = vpop.f32.mrf.mxu0
          %v1373 = vadd.f32 0.0, %v1372
          %1374 = vmatmul.f32.gmra.mxu0 %v1344
          %v1375 = vpop.f32.mrf.mxu0
          %v1376 = vadd.f32 0.0, %v1375
          %1377 = vmatmul.f32.gmra.mxu0 %v1346
          %v1378 = vpop.f32.mrf.mxu0
          %v1379 = vadd.f32 0.0, %v1378
          %1380 = vdwg.mxu0
          %1381 = vmatpush.msra.mxu0 %v810
          %1382 = vmatpush.msra.mxu0 %v809
          %1383 = vmatpush.msra.mxu0 %v808
          %1384 = vmatpush.msra.mxu0 %v807
          %1385 = vmatpush.msra.mxu0 %v806
          %1386 = vmatpush.msra.mxu0 %v805
          %1387 = vmatpush.msra.mxu0 %v804
          %1388 = vmatpush.msra.mxu0 %v803
          %1389 = vmatpush.msra.mxu0 %v802
          %1390 = vmatpush.msra.mxu0 %v801
          %1391 = vmatpush.msra.mxu0 %v800
          %1392 = vmatpush.msra.mxu0 %v799
          %1393 = vmatpush.msra.mxu0 %v798
          %1394 = vmatpush.msra.mxu0 %v797
          %1395 = vmatpush.msra.mxu0 %v796
          %1396 = vmatpush.msra.mxu0 %v795
          %1397 = vmatmul.f32.gmra.mxu0 %v1341
          %v1398 = vpop.f32.mrf.mxu0
          %v1399 = vadd.f32 %v1370, %v1398
          %1400 = vmatmul.f32.gmra.mxu0 %v1343
          %v1401 = vpop.f32.mrf.mxu0
          %v1402 = vadd.f32 %v1373, %v1401
          %1403 = vmatmul.f32.gmra.mxu0 %v1345
          %v1404 = vpop.f32.mrf.mxu0
          %v1405 = vadd.f32 %v1376, %v1404
          %1406 = vmatmul.f32.gmra.mxu0 %v1347
          %v1407 = vpop.f32.mrf.mxu0
          %v1408 = vadd.f32 %v1379, %v1407
          %1409 = vdwg.mxu0
          %v1410 = vadd.f32 %v1348, %v1399
          %v1411 = vadd.f32 %v1349, %v1402
          %v1412 = vadd.f32 %v1350, %v1405
          %v1413 = vadd.f32 %v1351, %v1408
          %1414 = vst.msk [vmem:[#allocation6] sm:$0xff] %vm1149, %v1410
          %1415 = vst.msk [vmem:[#allocation6 + $0x8] sm:$0xff] %vm1149, %v1411
          %1416 = vst.msk [vmem:[#allocation6 + $0x10] sm:$0xff] %vm1149, %v1412
          %1417 = vst.msk [vmem:[#allocation6 + $0x18] sm:$0xff] %vm1149, %v1413
        $region60: #{tpu_custom_call.1} parent=43 // pred_fallthru
          _
        // Predicated region
        $region61: #{tpu_custom_call.1} parent=43 // pred_check
          %p1418 = pneg %p187
        $region62: #{tpu_custom_call.1} parent=43 // pred_check_branch
          %1420 = sbr.rel (%p1418) target = $region64
        $region63: #{tpu_custom_call.1} parent=43 // pred_region
          %1422 = vsyncadd [#allocation7], 0
          %s1423 = sshll.u32 [#allocation6], 4
          %s1424 = int_to_ptr.vmem [resolvable:$true] %s1423
          %s1425 = sshll.u32 %s6, 4
          %s1426 = int_to_ptr.hbm [resolvable:$true] %s1425
          %1431 = dma.vmem_to_hbm [thread:$0]  %s1424, 512, %s1426, [#allocation7], 128, 128, 8
        $region64: #{tpu_custom_call.1} parent=43 // pred_fallthru
          _
        // Predicated region
        $region65: #{tpu_custom_call.1} parent=43 // pred_check
          %p1432 = pneg %p208
        $region66: #{tpu_custom_call.1} parent=43 // pred_check_branch
          %1434 = sbr.rel (%p1432) target = $region68
        $region67: #{tpu_custom_call.1} parent=43 // pred_region
          %1436 = vsyncadd [#allocation9], 0
          %s1438 = sshll.u32 [#allocation8], 4
          %s1439 = int_to_ptr.vmem [resolvable:$true] %s1438
          %s1440 = sshll.u32 %s7, 4
          %s1441 = int_to_ptr.hbm [resolvable:$true] %s1440
          %1443 = dma.vmem_to_hbm [thread:$0]  %s1439, 256, %s1441, [#allocation9]
        $region68: #{tpu_custom_call.1} parent=43 // pred_fallthru
          _
        // Predicated region
        $region69: #{tpu_custom_call.1} parent=43 // pred_check
          %p1444 = pneg %p187
        $region70: #{tpu_custom_call.1} parent=43 // pred_check_branch
          %1446 = sbr.rel (%p1444) target = $region72
        $region71: #{tpu_custom_call.1} parent=43 // pred_region
          %1448 = dma.done [#allocation7], 512
        $region72: #{tpu_custom_call.1} parent=43 // pred_fallthru
          _
        // Predicated region
        $region73: #{tpu_custom_call.1} parent=43 // pred_check
          %p1449 = pneg %p208
        $region74: #{tpu_custom_call.1} parent=43 // pred_check_branch
          %1451 = sbr.rel (%p1449) target = $region76
        $region75: #{tpu_custom_call.1} parent=43 // pred_region
          %1453 = dma.done [#allocation9], 256
        $region76: #{tpu_custom_call.1} parent=43 // pred_fallthru
          _
      $region44: #{tpu_custom_call.1} parent=5 // pred_fallthru
        _
      %p1454 = scmp.le.s32.totalorder 2, %s16
      // Predicated region
      $region77: #{tpu_custom_call.1} parent=5 // pred_check
        %p1455 = pneg %p1454
      $region78: #{tpu_custom_call.1} parent=5 // pred_check_branch
        %1457 = sbr.rel (%p1455) target = $region80
      $region79: #{tpu_custom_call.1} parent=5 // pred_region
        %s1458 = ssub.s32 %s16, 2
      $region80: #{tpu_custom_call.1} parent=5 // pred_fallthru
        _
    $region6: #{tpu_custom_call.1} parent=1 // loop_footer
      %s20 = sadd.s32 1, %s16
    $region7: #{tpu_custom_call.1} parent=1 // loop_footer_branch
      %15 = sbr.rel target = $region3
    $region8: #{tpu_custom_call.1} parent=1 // loop_exit
      _
    %1459 = vsyncpa [#allocation7], 1
    %s1460 = scalar_lea.sflag [#allocation7], 1
    %1461 = vsyncpa %s1460, 1
    %1462 = vsyncpa [#allocation9], 1

</llo_original>
